<compile_context>
chip_gen: v7x
topology: tpu7x:2x2x1
jax: 0.10.0
libtpu: 0.0.40
codegen_flags: <defaults>
</compile_context>

<pallas_src>
import math

import jax
import jax.numpy as jnp
from jax.experimental import pallas as pl
from jax.experimental.pallas import tpu as pltpu


def _make_mha_kernel(n_heads, d_k, bt, seq, emb, has_mask, shared_qkv):
    inv_sqrt_dk = 1.0 / math.sqrt(d_k)
    n_tokens = bt * seq
    n_groups = bt * n_heads

    def kernel(*refs):
        if shared_qkv:
            q_ref = k_ref = v_ref = refs[0]
            i = 1
        else:
            q_ref, k_ref, v_ref = refs[:3]
            i = 3
        wq_ref, wk_ref, wv_ref, wo_ref = refs[i:i + 4]
        i += 4
        mask_ref = refs[i] if has_mask else None
        o_ref = refs[-1]

        # (bt, S, E) -> (bt*S, E): leading-dim merge only (layout-free).
        if shared_qkv:
            xq = xk = xv = q_ref[...].reshape(n_tokens, emb)
        else:
            xq = q_ref[...].reshape(n_tokens, emb)
            xk = k_ref[...].reshape(n_tokens, emb)
            xv = v_ref[...].reshape(n_tokens, emb)

        # Input projections on the merged token matrix (M = bt*S).  Weights
        # were pre-transposed to (in, out) in the wrapper -> plain NN matmul.
        Q = jnp.dot(xq, wq_ref[...], preferred_element_type=jnp.float32)
        K = jnp.dot(xk, wk_ref[...], preferred_element_type=jnp.float32)
        V = jnp.dot(xv, wv_ref[...], preferred_element_type=jnp.float32)
        # TODO(synk): at production sizes cast matmul operands to bf16 (keep
        # f32 accumulation) for ~2x MXU throughput; kept f32 here so the
        # correctness check stays tight.

        # Split heads with one reshape + transpose per tensor and merge
        # (batch, head) onto a single leading batch axis g = b*H + h.
        def split_heads(x):  # (bt*S, E) -> (bt*H, S, d_k)
            return (x.reshape(bt, seq, n_heads, d_k)
                     .transpose(0, 2, 1, 3)
                     .reshape(n_groups, seq, d_k))

        Qh, Kh, Vh = split_heads(Q), split_heads(K), split_heads(V)

        # scores[g, q, k] = <Q_g[q], K_g[k]> / sqrt(d_k)
        scores = jnp.einsum('gqd,gkd->gqk', Qh, Kh,
                            preferred_element_type=jnp.float32) * inv_sqrt_dk

        if has_mask:
            # PyTorch parity: attention_scores.masked_fill_(mask == 0, -1e-05)
            # mask_ref holds a wrapper-precomputed {0.,1.} indicator (1 where
            # the original mask == 0), so no fragile float-equality in-kernel.
            masked = mask_ref[...]                       # (S, S)
            scores = jnp.where(masked[None, :, :] != 0,
                               jnp.float32(-1e-05), scores)

        # Numerically-stable softmax; normalisation applied AFTER the PV
        # matmul (G*S*d_k scaled elements instead of G*S*S).  Exact reciprocal
        # on a tiny (G, S, 1) tensor keeps the output bit-accurate.
        scores = scores - jnp.max(scores, axis=-1, keepdims=True)
        p = jnp.exp(scores)
        l = jnp.sum(p, axis=-1, keepdims=True)           # (G, S, 1)
        # TODO(synk): optional nn.Dropout on the attention probabilities is not
        # implemented (inference path; would use pltpu.prng_* if needed).

        ctx = jnp.einsum('gqk,gkd->gqd', p, Vh,
                         preferred_element_type=jnp.float32)   # (G, S, d_k)
        ctx = ctx * (jnp.float32(1.0) / l)

        # (bt*H, S, d_k) -> (bt, S, H*d_k = E) -> (bt*S, E): matches the
        # PyTorch transpose(2, 1).contiguous().view(...).
        ctx_flat = (ctx.reshape(bt, n_heads, seq, d_k)
                       .transpose(0, 2, 1, 3)
                       .reshape(n_tokens, emb))

        out = jnp.dot(ctx_flat, wo_ref[...], preferred_element_type=jnp.float32)
        o_ref[...] = out.reshape(bt, seq, emb).astype(o_ref.dtype)

    return kernel


def _pick_bt(B, S):
    """Largest batch fold bt (divisor of B) such that the merged token block
    stays within one 256-row MXU pass (v6e/v7x; use 128 on v5e) while the grid
    keeps >= 2 steps so the "parallel" axis shards across v7x's 2 TensorCores."""
    bt = 1
    for cand in range(1, B + 1):
        if B % cand != 0:
            continue
        if cand * S > 256:
            continue
        if B >= 2 and B // cand < 2:
            continue
        bt = cand
    # TODO(synk): non-divisor / prime B falls back to smaller bt; pad B in the
    # wrapper and use pl.cdiv if odd batch sizes matter at scale.
    return bt


def masked_mha_forward(q, k, v, wq, wk, wv, wo, mask=None, *, n_heads):
    """q, k, v: (B, S, E).  wq/wk/wv/wo: nn.Linear weights (out, in) layout.
    mask: optional (S, S); positions where mask == 0 get score -1e-05
    (PyTorch masked_fill parity)."""
    B, S, E = q.shape
    assert E % n_heads == 0, "embedding_dim not divisible by n_heads"
    d_k = E // n_heads
    shared_qkv = (q is k) and (k is v)
    has_mask = mask is not None

    bt = _pick_bt(B, S)
    grid = (B // bt,)

    # One-time wrapper-side transpose of the nn.Linear weights so the kernel
    # never re-transposes grid-invariant weights per step.
    wq_t = jnp.asarray(wq).T
    wk_t = jnp.asarray(wk).T
    wv_t = jnp.asarray(wv).T
    wo_t = jnp.asarray(wo).T

    kernel = _make_mha_kernel(n_heads, d_k, bt, S, E, has_mask, shared_qkv)

    seq_spec = pl.BlockSpec((bt, S, E), lambda i: (i, 0, 0))
    w_spec = pl.BlockSpec((E, E), lambda i: (0, 0))
    # TODO(synk): at production E give the grid-invariant weight/mask specs
    # pipeline_mode=pl.Buffered(1) to avoid double-buffered weight copies in
    # VMEM (kept default here for maximum lowering compatibility).

    in_specs, args = [], []
    if shared_qkv:
        in_specs.append(seq_spec)
        args.append(q)
    else:
        in_specs += [seq_spec, seq_spec, seq_spec]
        args += [q, k, v]
    in_specs += [w_spec, w_spec, w_spec, w_spec]
    args += [wq_t, wk_t, wv_t, wo_t]
    if has_mask:
        mask = jnp.asarray(mask)
        assert mask.shape == (S, S), "mask must be (S, S)"
        masked_ind = (mask == 0).astype(jnp.float32)   # precomputed indicator
        in_specs.append(pl.BlockSpec((S, S), lambda i: (0, 0)))
        args.append(masked_ind)

    # Rough VMEM budget: double-buffered I/O blocks + weights (+mask) plus the
    # live scores/probs/context intermediates, with 2x headroom.
    itemsize = 4
    n_in_streams = 1 if shared_qkv else 3
    block_bytes = bt * S * E * itemsize
    est = (2 * (n_in_streams + 1) * block_bytes
           + 2 * 4 * E * E * itemsize
           + (2 * S * S * itemsize if has_mask else 0)
           + 4 * bt * n_heads * S * S * itemsize
           + 8 * block_bytes)
    vmem_limit = int(min(128 * 1024 * 1024, max(32 * 1024 * 1024, 2 * est)))

    return pl.pallas_call(
        kernel,
        out_shape=jax.ShapeDtypeStruct((B, S, E), q.dtype),
        grid_spec=pltpu.PrefetchScalarGridSpec(
            num_scalar_prefetch=0,
            grid=grid,
            in_specs=in_specs,
            out_specs=seq_spec,
        ),
        compiler_params=pltpu.CompilerParams(
            dimension_semantics=("parallel",),
            vmem_limit_bytes=vmem_limit),
    )(*args)


def _reference_mha(q, k, v, wq, wk, wv, wo, mask, *, n_heads):
    """Pure-JAX re-implementation of the PyTorch forward (highest precision so
    the check is against accurate f32 math on any backend)."""
    B, S, E = q.shape
    d_k = E // n_heads
    hi = jax.lax.Precision.HIGHEST
    Q = jnp.einsum('bse,oe->bso', q, wq, precision=hi)
    K = jnp.einsum('bse,oe->bso', k, wk, precision=hi)
    V = jnp.einsum('bse,oe->bso', v, wv, precision=hi)
    Q = Q.reshape(B, S, n_heads, d_k).transpose(0, 2, 1, 3)   # (B, H, S, d_k)
    K = K.reshape(B, S, n_heads, d_k).transpose(0, 2, 1, 3)
    V = V.reshape(B, S, n_heads, d_k).transpose(0, 2, 1, 3)
    scores = jnp.einsum('bhqd,bhkd->bhqk', Q, K, precision=hi) / math.sqrt(d_k)
    if mask is not None:
        scores = jnp.where(mask == 0, -1e-05, scores)
    attn = jax.nn.softmax(scores, axis=-1)
    out = jnp.einsum('bhqk,bhkd->bhqd', attn, V, precision=hi)
    out = out.transpose(0, 2, 1, 3).reshape(B, S, E)
    return jnp.einsum('bse,oe->bso', out, wo, precision=hi)


if __name__ == "__main__":
    B, S, E, H = 2, 8, 32, 4

    key = jax.random.PRNGKey(0)
    kq, kk, kv, k1, k2, k3, k4 = jax.random.split(key, 7)

    q = jax.random.normal(kq, (B, S, E), dtype=jnp.float32)
    k = jax.random.normal(kk, (B, S, E), dtype=jnp.float32)
    v = jax.random.normal(kv, (B, S, E), dtype=jnp.float32)

    scale = 1.0 / math.sqrt(E)
    wq = jax.random.normal(k1, (E, E), dtype=jnp.float32) * scale
    wk = jax.random.normal(k2, (E, E), dtype=jnp.float32) * scale
    wv = jax.random.normal(k3, (E, E), dtype=jnp.float32) * scale
    wo = jax.random.normal(k4, (E, E), dtype=jnp.float32) * scale

    # Tolerance note: the kernel accumulates in f32; on hardware backends the
    # MXU handles f32 operands via multi-pass bf16, so allow ~1% deviation from
    # the HIGHEST-precision reference (a transposed weight or mis-ordered head
    # would produce O(1) errors, so this still catches real bugs).
    tol = dict(rtol=2e-2, atol=2e-2)

    # Cross-attention style call (distinct q/k/v) with a causal mask:
    # masked_fill(mask == 0, -1e-05) parity.
    causal = jnp.tril(jnp.ones((S, S), dtype=jnp.float32))
    out_m = jax.block_until_ready(
        masked_mha_forward(q, k, v, wq, wk, wv, wo, causal, n_heads=H))
    ref_m = _reference_mha(q, k, v, wq, wk, wv, wo, causal, n_heads=H)
    assert out_m.shape == (B, S, E)
    assert jnp.allclose(out_m, ref_m, **tol), "mismatch (masked)"

    # Self-attention call (the module's own usage: m(x, x, x, None)); exercises
    # the shared-qkv single-input-stream path.
    out = jax.block_until_ready(
        masked_mha_forward(q, q, q, wq, wk, wv, wo, None, n_heads=H))
    ref = _reference_mha(q, q, q, wq, wk, wv, wo, None, n_heads=H)
    assert out.shape == (B, S, E)
    assert jnp.allclose(out, ref, **tol), "mismatch (self-attn, mask=None)"

    print("KERNEL_OK")
</pallas_src>

<mosaic_0001>
module attributes {stable_mosaic.version = 11 : i64} {
  func.func @kernel(%arg0: i32, %arg1: memref<1x8x32xf32, #tpu.memory_space<vmem>>, %arg2: memref<1x8x32xf32, #tpu.memory_space<vmem>>, %arg3: memref<1x8x32xf32, #tpu.memory_space<vmem>>, %arg4: memref<32x32xf32, #tpu.memory_space<vmem>>, %arg5: memref<32x32xf32, #tpu.memory_space<vmem>>, %arg6: memref<32x32xf32, #tpu.memory_space<vmem>>, %arg7: memref<32x32xf32, #tpu.memory_space<vmem>>, %arg8: memref<8x8xf32, #tpu.memory_space<vmem>>, %arg9: memref<1x8x32xf32, #tpu.memory_space<vmem>>) attributes {dimension_semantics = [#tpu.dimension_semantics<parallel>], iteration_bounds = array<i64: 2>, scalar_prefetch = 0 : i64, scratch_operands = 0 : i64, tpu.core_type = #tpu.core_type<tc>, window_params = [{transform_indices = @transform_0, window_bounds = array<i64: 1, 8, 32>}, {transform_indices = @transform_1, window_bounds = array<i64: 1, 8, 32>}, {transform_indices = @transform_2, window_bounds = array<i64: 1, 8, 32>}, {pipeline_mode = #tpu.pipeline_mode<synchronous>, transform_indices = @transform_3, window_bounds = array<i64: 32, 32>}, {pipeline_mode = #tpu.pipeline_mode<synchronous>, transform_indices = @transform_4, window_bounds = array<i64: 32, 32>}, {pipeline_mode = #tpu.pipeline_mode<synchronous>, transform_indices = @transform_5, window_bounds = array<i64: 32, 32>}, {pipeline_mode = #tpu.pipeline_mode<synchronous>, transform_indices = @transform_6, window_bounds = array<i64: 32, 32>}, {pipeline_mode = #tpu.pipeline_mode<synchronous>, transform_indices = @transform_7, window_bounds = array<i64: 8, 8>}, {transform_indices = @transform_8, window_bounds = array<i64: 1, 8, 32>}]} {
    %c0 = arith.constant 0 : index
    %c0_0 = arith.constant 0 : index
    %c0_1 = arith.constant 0 : index
    %0 = vector.load %arg1[%c0, %c0_0, %c0_1] : memref<1x8x32xf32, #tpu.memory_space<vmem>>, vector<1x8x32xf32>
    %1 = vector.shape_cast %0 : vector<1x8x32xf32> to vector<8x32xf32>
    %c0_2 = arith.constant 0 : index
    %c0_3 = arith.constant 0 : index
    %c0_4 = arith.constant 0 : index
    %2 = vector.load %arg2[%c0_2, %c0_3, %c0_4] : memref<1x8x32xf32, #tpu.memory_space<vmem>>, vector<1x8x32xf32>
    %3 = vector.shape_cast %2 : vector<1x8x32xf32> to vector<8x32xf32>
    %c0_5 = arith.constant 0 : index
    %c0_6 = arith.constant 0 : index
    %c0_7 = arith.constant 0 : index
    %4 = vector.load %arg3[%c0_5, %c0_6, %c0_7] : memref<1x8x32xf32, #tpu.memory_space<vmem>>, vector<1x8x32xf32>
    %5 = vector.shape_cast %4 : vector<1x8x32xf32> to vector<8x32xf32>
    %c0_8 = arith.constant 0 : index
    %c0_9 = arith.constant 0 : index
    %6 = vector.load %arg4[%c0_8, %c0_9] : memref<32x32xf32, #tpu.memory_space<vmem>>, vector<32x32xf32>
    %cst = arith.constant dense<0.000000e+00> : vector<8x32xf32>
    %7 = tpu.matmul %1, %6, %cst {dimension_numbers = #tpu.dot_dimension_numbers<[1], [0], [0], [1], [0, 0, 1, 1], [], []>} : vector<8x32xf32>, vector<32x32xf32>, vector<8x32xf32> -> vector<8x32xf32>
    %c0_10 = arith.constant 0 : index
    %c0_11 = arith.constant 0 : index
    %8 = vector.load %arg5[%c0_10, %c0_11] : memref<32x32xf32, #tpu.memory_space<vmem>>, vector<32x32xf32>
    %cst_12 = arith.constant dense<0.000000e+00> : vector<8x32xf32>
    %9 = tpu.matmul %3, %8, %cst_12 {dimension_numbers = #tpu.dot_dimension_numbers<[1], [0], [0], [1], [0, 0, 1, 1], [], []>} : vector<8x32xf32>, vector<32x32xf32>, vector<8x32xf32> -> vector<8x32xf32>
    %c0_13 = arith.constant 0 : index
    %c0_14 = arith.constant 0 : index
    %10 = vector.load %arg6[%c0_13, %c0_14] : memref<32x32xf32, #tpu.memory_space<vmem>>, vector<32x32xf32>
    %cst_15 = arith.constant dense<0.000000e+00> : vector<8x32xf32>
    %11 = tpu.matmul %5, %10, %cst_15 {dimension_numbers = #tpu.dot_dimension_numbers<[1], [0], [0], [1], [0, 0, 1, 1], [], []>} : vector<8x32xf32>, vector<32x32xf32>, vector<8x32xf32> -> vector<8x32xf32>
    %12 = vector.shape_cast %7 : vector<8x32xf32> to vector<1x8x4x8xf32>
    %13 = tpu.transpose %12, [0, 2, 1, 3] : vector<1x8x4x8xf32> -> vector<1x4x8x8xf32>
    %14 = vector.shape_cast %13 : vector<1x4x8x8xf32> to vector<4x8x8xf32>
    %15 = vector.shape_cast %9 : vector<8x32xf32> to vector<1x8x4x8xf32>
    %16 = tpu.transpose %15, [0, 2, 1, 3] : vector<1x8x4x8xf32> -> vector<1x4x8x8xf32>
    %17 = vector.shape_cast %16 : vector<1x4x8x8xf32> to vector<4x8x8xf32>
    %18 = vector.shape_cast %11 : vector<8x32xf32> to vector<1x8x4x8xf32>
    %19 = tpu.transpose %18, [0, 2, 1, 3] : vector<1x8x4x8xf32> -> vector<1x4x8x8xf32>
    %20 = vector.shape_cast %19 : vector<1x4x8x8xf32> to vector<4x8x8xf32>
    "tpu.trace_start"() <{level = 10 : i32, message = "gqd,gkd->gqk"}> : () -> ()
    %cst_16 = arith.constant dense<0.000000e+00> : vector<4x8x8xf32>
    %21 = tpu.matmul %14, %17, %cst_16 {dimension_numbers = #tpu.dot_dimension_numbers<[2], [2], [1], [1], [0, 0, 0, 1, 1, 1], [0], [0]>} : vector<4x8x8xf32>, vector<4x8x8xf32>, vector<4x8x8xf32> -> vector<4x8x8xf32>
    "tpu.trace_stop"() : () -> ()
    %cst_17 = arith.constant 0.353553385 : f32
    %22 = vector.broadcast %cst_17 : f32 to vector<4x8x8xf32>
    %23 = arith.mulf %21, %22 : vector<4x8x8xf32>
    %c0_18 = arith.constant 0 : index
    %c0_19 = arith.constant 0 : index
    %24 = vector.load %arg8[%c0_18, %c0_19] : memref<8x8xf32, #tpu.memory_space<vmem>>, vector<8x8xf32>
    %25 = vector.shape_cast %24 : vector<8x8xf32> to vector<1x8x8xf32>
    %cst_20 = arith.constant 0.000000e+00 : f32
    %26 = vector.broadcast %cst_20 : f32 to vector<1x8x8xf32>
    %27 = arith.cmpf one, %25, %26 : vector<1x8x8xf32>
    %cst_21 = arith.constant -9.99999974E-6 : f32
    %28 = vector.shape_cast %27 : vector<1x8x8xi1> to vector<1x8x8xi1>
    %29 = vector.broadcast %28 : vector<1x8x8xi1> to vector<4x8x8xi1>
    %30 = vector.broadcast %cst_21 : f32 to vector<4x8x8xf32>
    %31 = arith.select %29, %30, %23 : vector<4x8x8xi1>, vector<4x8x8xf32>
    %cst_22 = arith.constant dense<0xFF800000> : vector<4x8xf32>
    %32 = vector.multi_reduction <maximumf>, %31, %cst_22 [2] : vector<4x8x8xf32> to vector<4x8xf32>
    %33 = vector.shape_cast %32 : vector<4x8xf32> to vector<4x8x1xf32>
    %34 = vector.broadcast %33 : vector<4x8x1xf32> to vector<4x8x8xf32>
    %35 = arith.subf %31, %34 : vector<4x8x8xf32>
    %36 = math.exp %35 : vector<4x8x8xf32>
    %cst_23 = arith.constant dense<0.000000e+00> : vector<4x8xf32>
    %37 = vector.multi_reduction <add>, %36, %cst_23 [2] : vector<4x8x8xf32> to vector<4x8xf32>
    %38 = vector.shape_cast %37 : vector<4x8xf32> to vector<4x8x1xf32>
    "tpu.trace_start"() <{level = 10 : i32, message = "gqk,gkd->gqd"}> : () -> ()
    %cst_24 = arith.constant dense<0.000000e+00> : vector<4x8x8xf32>
    %39 = tpu.matmul %36, %20, %cst_24 {dimension_numbers = #tpu.dot_dimension_numbers<[2], [1], [1], [2], [0, 0, 0, 1, 1, 2], [0], [0]>} : vector<4x8x8xf32>, vector<4x8x8xf32>, vector<4x8x8xf32> -> vector<4x8x8xf32>
    "tpu.trace_stop"() : () -> ()
    %cst_25 = arith.constant 1.000000e+00 : f32
    %40 = vector.broadcast %cst_25 : f32 to vector<4x8x1xf32>
    %41 = arith.divf %40, %38 : vector<4x8x1xf32>
    %42 = vector.broadcast %41 : vector<4x8x1xf32> to vector<4x8x8xf32>
    %43 = arith.mulf %39, %42 : vector<4x8x8xf32>
    %44 = vector.shape_cast %43 : vector<4x8x8xf32> to vector<1x4x8x8xf32>
    %45 = tpu.transpose %44, [0, 2, 1, 3] : vector<1x4x8x8xf32> -> vector<1x8x4x8xf32>
    %46 = vector.shape_cast %45 : vector<1x8x4x8xf32> to vector<8x32xf32>
    %c0_26 = arith.constant 0 : index
    %c0_27 = arith.constant 0 : index
    %47 = vector.load %arg7[%c0_26, %c0_27] : memref<32x32xf32, #tpu.memory_space<vmem>>, vector<32x32xf32>
    %cst_28 = arith.constant dense<0.000000e+00> : vector<8x32xf32>
    %48 = tpu.matmul %46, %47, %cst_28 {dimension_numbers = #tpu.dot_dimension_numbers<[1], [0], [0], [1], [0, 0, 1, 1], [], []>} : vector<8x32xf32>, vector<32x32xf32>, vector<8x32xf32> -> vector<8x32xf32>
    %49 = vector.shape_cast %48 : vector<8x32xf32> to vector<1x8x32xf32>
    %c0_29 = arith.constant 0 : index
    %c0_30 = arith.constant 0 : index
    %c0_31 = arith.constant 0 : index
    %50 = vector.load %arg9[%c0_29, %c0_30, %c0_31] : memref<1x8x32xf32, #tpu.memory_space<vmem>>, vector<1x8x32xf32>
    tpu.vector_store %arg9[%c0_29, %c0_30, %c0_31], %49 {strides = array<i32>} : memref<1x8x32xf32, #tpu.memory_space<vmem>>, vector<1x8x32xf32>,
    return
  }
  func.func @transform_0(%arg0: i32) -> (i32, i32, i32) {
    %c0_i32 = arith.constant 0 : i32
    %c0_i32_0 = arith.constant 0 : i32
    %c0_i32_1 = arith.constant 0 : i32
    return %arg0, %c0_i32, %c0_i32_0 : i32, i32, i32
  }
  func.func @transform_1(%arg0: i32) -> (i32, i32, i32) {
    %c0_i32 = arith.constant 0 : i32
    %c0_i32_0 = arith.constant 0 : i32
    %c0_i32_1 = arith.constant 0 : i32
    return %arg0, %c0_i32, %c0_i32_0 : i32, i32, i32
  }
  func.func @transform_2(%arg0: i32) -> (i32, i32, i32) {
    %c0_i32 = arith.constant 0 : i32
    %c0_i32_0 = arith.constant 0 : i32
    %c0_i32_1 = arith.constant 0 : i32
    return %arg0, %c0_i32, %c0_i32_0 : i32, i32, i32
  }
  func.func @transform_3(%arg0: i32) -> (i32, i32) {
    %c0_i32 = arith.constant 0 : i32
    %c0_i32_0 = arith.constant 0 : i32
    %c0_i32_1 = arith.constant 0 : i32
    return %c0_i32, %c0_i32_0 : i32, i32
  }
  func.func @transform_4(%arg0: i32) -> (i32, i32) {
    %c0_i32 = arith.constant 0 : i32
    %c0_i32_0 = arith.constant 0 : i32
    %c0_i32_1 = arith.constant 0 : i32
    return %c0_i32, %c0_i32_0 : i32, i32
  }
  func.func @transform_5(%arg0: i32) -> (i32, i32) {
    %c0_i32 = arith.constant 0 : i32
    %c0_i32_0 = arith.constant 0 : i32
    %c0_i32_1 = arith.constant 0 : i32
    return %c0_i32, %c0_i32_0 : i32, i32
  }
  func.func @transform_6(%arg0: i32) -> (i32, i32) {
    %c0_i32 = arith.constant 0 : i32
    %c0_i32_0 = arith.constant 0 : i32
    %c0_i32_1 = arith.constant 0 : i32
    return %c0_i32, %c0_i32_0 : i32, i32
  }
  func.func @transform_7(%arg0: i32) -> (i32, i32) {
    %c0_i32 = arith.constant 0 : i32
    %c0_i32_0 = arith.constant 0 : i32
    %c0_i32_1 = arith.constant 0 : i32
    return %c0_i32, %c0_i32_0 : i32, i32
  }
  func.func @transform_8(%arg0: i32) -> (i32, i32, i32) {
    %c0_i32 = arith.constant 0 : i32
    %c0_i32_0 = arith.constant 0 : i32
    %c0_i32_1 = arith.constant 0 : i32
    return %arg0, %c0_i32, %c0_i32_0 : i32, i32, i32
  }
}

</mosaic_0001>

<llo_original>
// kernel: tpu_custom_call.1
$region0: #{tpu_custom_call.1}
  #allocation0 [shape = 'u32[]', space=smem, size = 0x4, offset = 0x4, fixed_abs, tag = 'smem constant byte address 0x4 - core index']
  #allocation1 [shape = 'u32[144,128]{1,0:T(1,128)}', space=vmem, size = 0x12000, scoped, tag = 'internal scratch']
  %s0 = inlined_call_operand.hbm [shape: f32[2,8,32], index: 0, kind: input, shape index: {}]
  %s1 = inlined_call_operand.hbm [shape: f32[2,8,32], index: 1, kind: input, shape index: {}]
  %s2 = inlined_call_operand.hbm [shape: f32[2,8,32], index: 2, kind: input, shape index: {}]
  %s3 = inlined_call_operand.hbm [shape: f32[32,32], index: 3, kind: input, shape index: {}]
  %s4 = inlined_call_operand.hbm [shape: f32[32,32], index: 4, kind: input, shape index: {}]
  %s5 = inlined_call_operand.hbm [shape: f32[32,32], index: 5, kind: input, shape index: {}]
  %s6 = inlined_call_operand.hbm [shape: f32[32,32], index: 6, kind: input, shape index: {}]
  %s7 = inlined_call_operand.vmem [shape: f32[8,8], index: 7, kind: input, shape index: {}]
  %s8 = inlined_call_operand.hbm [shape: f32[2,8,32], index: 8, kind: output, shape index: {}]
  %s9 = sld [smem:[#allocation0]]
  $region93: #{tpu_custom_call.1} parent=0
    _
  %s11 = ssub.s32 1, %s9
  %s12 = scalar_select 0, %s11, %s9
  $region1: #{tpu_custom_call.1} parent=0
    #allocation2 [shape = 'u8[8192]{0}', space=vmem, size = 0x2000, scoped, tag = 'input window, operand 0']
    #allocation3 [shape = 's32[2]{0}', space=sflag, size = 0x8, scoped, tag = 'scoped memory for tpu_custom_call.1']
    #allocation4 [shape = 's32[2]{0}', space=sflag, size = 0x8, scoped, tag = 'scoped memory for tpu_custom_call.1']
    #allocation5 [shape = 'u8[8192]{0}', space=vmem, size = 0x2000, scoped, tag = 'input window, operand 1']
    #allocation6 [shape = 's32[2]{0}', space=sflag, size = 0x8, scoped, tag = 'scoped memory for tpu_custom_call.1']
    #allocation7 [shape = 'u8[8192]{0}', space=vmem, size = 0x2000, scoped, tag = 'input window, operand 2']
    #allocation8 [shape = 'u8[16384]{0}', space=vmem, size = 0x4000, scoped, tag = 'input window, operand 3, single buffered']
    #allocation9 [shape = 's32[1]{0}', space=sflag, size = 0x4, scoped, tag = 'scoped memory for tpu_custom_call.1']
    #allocation10 [shape = 'u8[16384]{0}', space=vmem, size = 0x4000, scoped, tag = 'input window, operand 4, single buffered']
    #allocation11 [shape = 'u8[16384]{0}', space=vmem, size = 0x4000, scoped, tag = 'input window, operand 5, single buffered']
    #allocation12 [shape = 's32[1]{0}', space=sflag, size = 0x4, scoped, tag = 'scoped memory for tpu_custom_call.1']
    #allocation13 [shape = 'u8[16384]{0}', space=vmem, size = 0x4000, scoped, tag = 'input window, operand 6, single buffered']
    #allocation14 [shape = 'u8[8192]{0}', space=vmem, size = 0x2000, scoped, tag = 'output window, operand 0']
    %13 = vsyncpa [#allocation3], 0
    %s14 = scalar_lea.sflag [#allocation3], 1
    %15 = vsyncpa %s14, 0
    %16 = vsyncpa [#allocation6], 0
    %s17 = scalar_lea.sflag [#allocation6], 1
    %18 = vsyncpa %s17, 0
    %19 = vsyncpa [#allocation9], 0
    %20 = vsyncpa [#allocation12], 0
    %21 = vsyncpa [#allocation4], 0
    %s22 = scalar_lea.sflag [#allocation4], 1
    %23 = vsyncpa %s22, 0
    loop: start=0, step=1, limit=4
    $region2: #{tpu_custom_call.1} parent=1 // loop_pre_header
      _
    $region3: #{tpu_custom_call.1} parent=1 // loop_header
      %s25 = sphi 0, %s29
      %p26 = scmp.ge.s32.totalorder %s25, 4
      %s35 = sphi 0, %s37
      %s38 = sphi 0, %s35
      %s39 = sphi 0, %s38
      %s55 = sphi 0, %s39
      %s61 = sphi 0, %s63
      %s64 = sphi 0, %s61
      %s65 = sphi 0, %s64
      %s81 = sphi 0, %s65
      %s87 = sphi 0, %s89
      %s90 = sphi 0, %s87
      %s91 = sphi 0, %s90
      %s107 = sphi 0, %s91
      %s111 = sphi 0, %s111
      %s113 = sphi 0, %s111
      %s114 = sphi 0, %s113
      %s128 = sphi 0, %s114
      %s132 = sphi 0, %s132
      %s134 = sphi 0, %s132
      %s135 = sphi 0, %s134
      %s149 = sphi 0, %s135
      %s153 = sphi 0, %s153
      %s155 = sphi 0, %s153
      %s156 = sphi 0, %s155
      %s170 = sphi 0, %s156
      %s174 = sphi 0, %s174
      %s176 = sphi 0, %s174
      %s177 = sphi 0, %s176
      %s191 = sphi 0, %s177
      %s195 = sphi 0, %s195
      %s197 = sphi 0, %s195
      %s198 = sphi 0, %s197
      %s212 = sphi 0, %s198
      %s218 = sphi 0, %s220
      %s221 = sphi 0, %s218
      %s222 = sphi 0, %s221
      %s238 = sphi 0, %s222
    $region4: #{tpu_custom_call.1} parent=1 // loop_header_branch
      %28 = sbr.rel (%p26) target = $region8
    $region5: #{tpu_custom_call.1} parent=1 // loop_body
      %s30 = ssub.s32 %s25, 1
      %s31 = ssub.s32 %s25, 2
      %s32 = sadd.s32 %s25, 1
      %s33 = ssub.s32 %s25, %s32
      %p34 = scmp.eq.s32.totalorder %s33, 0
      %s36 = sadd.s32 %s35, 1
      %s37 = scalar_select %p34, %s35, %s36
      %p40 = pneg %p34
      %p41 = scmp.eq.s32.totalorder %s25, 1
      %p42 = por %p40, %p41
      %p43 = scmp.ne.s32.totalorder %s35, %s38
      %p44 = scmp.eq.s32.totalorder %s25, 0
      %p45 = por %p43, %p44
      %p46 = scmp.ne.s32.totalorder %s35, %s38
      %p47 = scmp.eq.s32.totalorder %s30, 1
      %p48 = por %p46, %p47
      %p49 = scmp.ne.s32.totalorder %s38, %s39
      %p50 = scmp.eq.s32.totalorder %s30, 0
      %p51 = por %p49, %p50
      %p52 = scmp.ne.s32.totalorder %s38, %s39
      %p53 = scmp.eq.s32.totalorder %s31, 1
      %p54 = por %p52, %p53
      %p56 = scmp.ne.s32.totalorder %s39, %s55
      %p57 = scmp.eq.s32.totalorder %s31, 0
      %p58 = por %p56, %p57
      %s59 = ssub.s32 %s25, %s32
      %p60 = scmp.eq.s32.totalorder %s59, 0
      %s62 = sadd.s32 %s61, 1
      %s63 = scalar_select %p60, %s61, %s62
      %p66 = pneg %p60
      %p67 = scmp.eq.s32.totalorder %s25, 1
      %p68 = por %p66, %p67
      %p69 = scmp.ne.s32.totalorder %s61, %s64
      %p70 = scmp.eq.s32.totalorder %s25, 0
      %p71 = por %p69, %p70
      %p72 = scmp.ne.s32.totalorder %s61, %s64
      %p73 = scmp.eq.s32.totalorder %s30, 1
      %p74 = por %p72, %p73
      %p75 = scmp.ne.s32.totalorder %s64, %s65
      %p76 = scmp.eq.s32.totalorder %s30, 0
      %p77 = por %p75, %p76
      %p78 = scmp.ne.s32.totalorder %s64, %s65
      %p79 = scmp.eq.s32.totalorder %s31, 1
      %p80 = por %p78, %p79
      %p82 = scmp.ne.s32.totalorder %s65, %s81
      %p83 = scmp.eq.s32.totalorder %s31, 0
      %p84 = por %p82, %p83
      %s85 = ssub.s32 %s25, %s32
      %p86 = scmp.eq.s32.totalorder %s85, 0
      %s88 = sadd.s32 %s87, 1
      %s89 = scalar_select %p86, %s87, %s88
      %p92 = pneg %p86
      %p93 = scmp.eq.s32.totalorder %s25, 1
      %p94 = por %p92, %p93
      %p95 = scmp.ne.s32.totalorder %s87, %s90
      %p96 = scmp.eq.s32.totalorder %s25, 0
      %p97 = por %p95, %p96
      %p98 = scmp.ne.s32.totalorder %s87, %s90
      %p99 = scmp.eq.s32.totalorder %s30, 1
      %p100 = por %p98, %p99
      %p101 = scmp.ne.s32.totalorder %s90, %s91
      %p102 = scmp.eq.s32.totalorder %s30, 0
      %p103 = por %p101, %p102
      %p104 = scmp.ne.s32.totalorder %s90, %s91
      %p105 = scmp.eq.s32.totalorder %s31, 1
      %p106 = por %p104, %p105
      %p108 = scmp.ne.s32.totalorder %s91, %s107
      %p109 = scmp.eq.s32.totalorder %s31, 0
      %p110 = por %p108, %p109
      %s112 = sadd.s32 %s111, 1
      %p115 = scmp.eq.s32.totalorder %s25, 1
      %p116 = scmp.ne.s32.totalorder %s111, %s113
      %p117 = scmp.eq.s32.totalorder %s25, 0
      %p118 = por %p116, %p117
      %p119 = scmp.ne.s32.totalorder %s111, %s113
      %p120 = scmp.eq.s32.totalorder %s30, 1
      %p121 = por %p119, %p120
      %p122 = scmp.ne.s32.totalorder %s113, %s114
      %p123 = scmp.eq.s32.totalorder %s30, 0
      %p124 = por %p122, %p123
      %p125 = scmp.ne.s32.totalorder %s113, %s114
      %p126 = scmp.eq.s32.totalorder %s31, 1
      %p127 = por %p125, %p126
      %p129 = scmp.ne.s32.totalorder %s114, %s128
      %p130 = scmp.eq.s32.totalorder %s31, 0
      %p131 = por %p129, %p130
      %s133 = sadd.s32 %s132, 1
      %p136 = scmp.eq.s32.totalorder %s25, 1
      %p137 = scmp.ne.s32.totalorder %s132, %s134
      %p138 = scmp.eq.s32.totalorder %s25, 0
      %p139 = por %p137, %p138
      %p140 = scmp.ne.s32.totalorder %s132, %s134
      %p141 = scmp.eq.s32.totalorder %s30, 1
      %p142 = por %p140, %p141
      %p143 = scmp.ne.s32.totalorder %s134, %s135
      %p144 = scmp.eq.s32.totalorder %s30, 0
      %p145 = por %p143, %p144
      %p146 = scmp.ne.s32.totalorder %s134, %s135
      %p147 = scmp.eq.s32.totalorder %s31, 1
      %p148 = por %p146, %p147
      %p150 = scmp.ne.s32.totalorder %s135, %s149
      %p151 = scmp.eq.s32.totalorder %s31, 0
      %p152 = por %p150, %p151
      %s154 = sadd.s32 %s153, 1
      %p157 = scmp.eq.s32.totalorder %s25, 1
      %p158 = scmp.ne.s32.totalorder %s153, %s155
      %p159 = scmp.eq.s32.totalorder %s25, 0
      %p160 = por %p158, %p159
      %p161 = scmp.ne.s32.totalorder %s153, %s155
      %p162 = scmp.eq.s32.totalorder %s30, 1
      %p163 = por %p161, %p162
      %p164 = scmp.ne.s32.totalorder %s155, %s156
      %p165 = scmp.eq.s32.totalorder %s30, 0
      %p166 = por %p164, %p165
      %p167 = scmp.ne.s32.totalorder %s155, %s156
      %p168 = scmp.eq.s32.totalorder %s31, 1
      %p169 = por %p167, %p168
      %p171 = scmp.ne.s32.totalorder %s156, %s170
      %p172 = scmp.eq.s32.totalorder %s31, 0
      %p173 = por %p171, %p172
      %s175 = sadd.s32 %s174, 1
      %p178 = scmp.eq.s32.totalorder %s25, 1
      %p179 = scmp.ne.s32.totalorder %s174, %s176
      %p180 = scmp.eq.s32.totalorder %s25, 0
      %p181 = por %p179, %p180
      %p182 = scmp.ne.s32.totalorder %s174, %s176
      %p183 = scmp.eq.s32.totalorder %s30, 1
      %p184 = por %p182, %p183
      %p185 = scmp.ne.s32.totalorder %s176, %s177
      %p186 = scmp.eq.s32.totalorder %s30, 0
      %p187 = por %p185, %p186
      %p188 = scmp.ne.s32.totalorder %s176, %s177
      %p189 = scmp.eq.s32.totalorder %s31, 1
      %p190 = por %p188, %p189
      %p192 = scmp.ne.s32.totalorder %s177, %s191
      %p193 = scmp.eq.s32.totalorder %s31, 0
      %p194 = por %p192, %p193
      %s196 = sadd.s32 %s195, 1
      %p199 = scmp.eq.s32.totalorder %s25, 1
      %p200 = scmp.ne.s32.totalorder %s195, %s197
      %p201 = scmp.eq.s32.totalorder %s25, 0
      %p202 = por %p200, %p201
      %p203 = scmp.ne.s32.totalorder %s195, %s197
      %p204 = scmp.eq.s32.totalorder %s30, 1
      %p205 = por %p203, %p204
      %p206 = scmp.ne.s32.totalorder %s197, %s198
      %p207 = scmp.eq.s32.totalorder %s30, 0
      %p208 = por %p206, %p207
      %p209 = scmp.ne.s32.totalorder %s197, %s198
      %p210 = scmp.eq.s32.totalorder %s31, 1
      %p211 = por %p209, %p210
      %p213 = scmp.ne.s32.totalorder %s198, %s212
      %p214 = scmp.eq.s32.totalorder %s31, 0
      %p215 = por %p213, %p214
      %s216 = ssub.s32 %s25, %s32
      %p217 = scmp.eq.s32.totalorder %s216, 0
      %s219 = sadd.s32 %s218, 1
      %s220 = scalar_select %p217, %s218, %s219
      %p223 = pneg %p217
      %p224 = scmp.eq.s32.totalorder %s25, 1
      %p225 = por %p223, %p224
      %p226 = scmp.ne.s32.totalorder %s218, %s221
      %p227 = scmp.eq.s32.totalorder %s25, 0
      %p228 = por %p226, %p227
      %p229 = scmp.ne.s32.totalorder %s218, %s221
      %p230 = scmp.eq.s32.totalorder %s30, 1
      %p231 = por %p229, %p230
      %p232 = scmp.ne.s32.totalorder %s221, %s222
      %p233 = scmp.eq.s32.totalorder %s30, 0
      %p234 = por %p232, %p233
      %p235 = scmp.ne.s32.totalorder %s221, %s222
      %p236 = scmp.eq.s32.totalorder %s31, 1
      %p237 = por %p235, %p236
      %p239 = scmp.ne.s32.totalorder %s222, %s238
      %p240 = scmp.eq.s32.totalorder %s31, 0
      %p241 = por %p239, %p240
      %p242 = scmp.le.s32.totalorder 1, %s25
      %p243 = scmp.lt.s32.totalorder %s25, 3
      %p244 = pnand %p242, %p243
      %p245 = pneg %p244
      // Predicated region
      $region9: #{tpu_custom_call.1} parent=5 // pred_check
        _
      $region10: #{tpu_custom_call.1} parent=5 // pred_check_branch
        %247 = sbr.rel (%p244) target = $region12
      $region11: #{tpu_custom_call.1} parent=5 // pred_region
        %s248 = ssub.s32 %s25, 1
        // Predicated region
        $region13: #{tpu_custom_call.1} parent=11 // pred_check
          %p249 = pneg %p124
        $region14: #{tpu_custom_call.1} parent=11 // pred_check_branch
          %251 = sbr.rel (%p249) target = $region16
        $region15: #{tpu_custom_call.1} parent=11 // pred_region
          %s253 = ssub.s32 512, 512
          %254 = vsyncadd [#allocation9], %s253
          %s255 = sshll.u32 [#allocation8], 4
          %s256 = int_to_ptr.vmem [resolvable:$true] %s255
          %261 = dma.hbm_to_vmem [thread:$0]  %s3, 512, %s256, [#allocation9], 128, 128, 8
        $region16: #{tpu_custom_call.1} parent=11 // pred_fallthru
          _
        // Predicated region
        $region17: #{tpu_custom_call.1} parent=11 // pred_check
          %p262 = pneg %p145
        $region18: #{tpu_custom_call.1} parent=11 // pred_check_branch
          %264 = sbr.rel (%p262) target = $region20
        $region19: #{tpu_custom_call.1} parent=11 // pred_region
          %s266 = ssub.s32 512, 512
          %267 = vsyncadd [#allocation9], %s266
          %s268 = sshll.u32 [#allocation10], 4
          %s269 = int_to_ptr.vmem [resolvable:$true] %s268
          %274 = dma.hbm_to_vmem [thread:$0]  %s4, 512, %s269, [#allocation9], 128, 128, 8
        $region20: #{tpu_custom_call.1} parent=11 // pred_fallthru
          _
        // Predicated region
        $region21: #{tpu_custom_call.1} parent=11 // pred_check
          %p275 = pneg %p166
        $region22: #{tpu_custom_call.1} parent=11 // pred_check_branch
          %277 = sbr.rel (%p275) target = $region24
        $region23: #{tpu_custom_call.1} parent=11 // pred_region
          %s279 = ssub.s32 512, 512
          %280 = vsyncadd [#allocation12], %s279
          %s281 = sshll.u32 [#allocation11], 4
          %s282 = int_to_ptr.vmem [resolvable:$true] %s281
          %287 = dma.hbm_to_vmem [thread:$0]  %s5, 512, %s282, [#allocation12], 128, 128, 8
        $region24: #{tpu_custom_call.1} parent=11 // pred_fallthru
          _
        // Predicated region
        $region25: #{tpu_custom_call.1} parent=11 // pred_check
          %p288 = pneg %p187
        $region26: #{tpu_custom_call.1} parent=11 // pred_check_branch
          %290 = sbr.rel (%p288) target = $region28
        $region27: #{tpu_custom_call.1} parent=11 // pred_region
          %s292 = ssub.s32 512, 512
          %293 = vsyncadd [#allocation12], %s292
          %s294 = sshll.u32 [#allocation13], 4
          %s295 = int_to_ptr.vmem [resolvable:$true] %s294
          %300 = dma.hbm_to_vmem [thread:$0]  %s6, 512, %s295, [#allocation12], 128, 128, 8
        $region28: #{tpu_custom_call.1} parent=11 // pred_fallthru
          _
        // Predicated region
        $region29: #{tpu_custom_call.1} parent=11 // pred_check
          %p301 = pneg %p208
        $region30: #{tpu_custom_call.1} parent=11 // pred_check_branch
          %303 = sbr.rel (%p301) target = $region32
        $region31: #{tpu_custom_call.1} parent=11 // pred_region
          _
        $region32: #{tpu_custom_call.1} parent=11 // pred_fallthru
          _
      $region12: #{tpu_custom_call.1} parent=5 // pred_fallthru
        _
      %p304 = scmp.lt.s32.totalorder %s25, 2
      // Predicated region
      $region33: #{tpu_custom_call.1} parent=5 // pred_check
        %p305 = pneg %p304
      $region34: #{tpu_custom_call.1} parent=5 // pred_check_branch
        %307 = sbr.rel (%p305) target = $region36
      $region35: #{tpu_custom_call.1} parent=5 // pred_region
        // Predicated region
        $region37: #{tpu_custom_call.1} parent=35 // pred_check
          %p308 = pneg %p45
        $region38: #{tpu_custom_call.1} parent=35 // pred_check_branch
          %310 = sbr.rel (%p308) target = $region40
        $region39: #{tpu_custom_call.1} parent=35 // pred_region
          %s311 = sand.u32 %s35, 1
          %s312 = scalar_lea.sflag [#allocation3], %s311
          %s313 = sand.u32 %s35, 1
          %s314 = smul.addr %s313, 8
          %s315 = scalar_lea.vmem [#allocation2], %s314
          %s317 = ssub.s32 128, 128
          %318 = vsyncadd %s312, %s317
          %s319 = smul.addr %s25, 128
          %s320 = scalar_lea.hbm %s0, %s319
          %s322 = sshll.u32 %s315, 4
          %s323 = int_to_ptr.vmem [resolvable:$true] %s322
          %325 = dma.hbm_to_vmem [thread:$0]  %s320, 128, %s323, %s312
        $region40: #{tpu_custom_call.1} parent=35 // pred_fallthru
          _
        // Predicated region
        $region41: #{tpu_custom_call.1} parent=35 // pred_check
          %p326 = pneg %p71
        $region42: #{tpu_custom_call.1} parent=35 // pred_check_branch
          %328 = sbr.rel (%p326) target = $region44
        $region43: #{tpu_custom_call.1} parent=35 // pred_region
          %s329 = sand.u32 %s25, 1
          %s330 = scalar_lea.sflag [#allocation6], %s329
          %s331 = sand.u32 %s61, 1
          %s332 = smul.addr %s331, 8
          %s333 = scalar_lea.vmem [#allocation5], %s332
          %s335 = ssub.s32 128, 128
          %336 = vsyncadd %s330, %s335
          %s337 = smul.addr %s25, 128
          %s338 = scalar_lea.hbm %s1, %s337
          %s340 = sshll.u32 %s333, 4
          %s341 = int_to_ptr.vmem [resolvable:$true] %s340
          %343 = dma.hbm_to_vmem [thread:$0]  %s338, 128, %s341, %s330
        $region44: #{tpu_custom_call.1} parent=35 // pred_fallthru
          _
        // Predicated region
        $region45: #{tpu_custom_call.1} parent=35 // pred_check
          %p344 = pneg %p97
        $region46: #{tpu_custom_call.1} parent=35 // pred_check_branch
          %346 = sbr.rel (%p344) target = $region48
        $region47: #{tpu_custom_call.1} parent=35 // pred_region
          %s347 = sand.u32 %s25, 1
          %s348 = scalar_lea.sflag [#allocation6], %s347
          %s349 = sand.u32 %s87, 1
          %s350 = smul.addr %s349, 8
          %s351 = scalar_lea.vmem [#allocation7], %s350
          %s353 = ssub.s32 128, 128
          %354 = vsyncadd %s348, %s353
          %s355 = smul.addr %s25, 128
          %s356 = scalar_lea.hbm %s2, %s355
          %s358 = sshll.u32 %s351, 4
          %s359 = int_to_ptr.vmem [resolvable:$true] %s358
          %361 = dma.hbm_to_vmem [thread:$0]  %s356, 128, %s359, %s348
        $region48: #{tpu_custom_call.1} parent=35 // pred_fallthru
          _
      $region36: #{tpu_custom_call.1} parent=5 // pred_fallthru
        _
      %p362 = scmp.le.s32.totalorder 1, %s25
      %p363 = scmp.lt.s32.totalorder %s25, 3
      %p364 = pnand %p362, %p363
      %p365 = pneg %p364
      // Predicated region
      $region49: #{tpu_custom_call.1} parent=5 // pred_check
        _
      $region50: #{tpu_custom_call.1} parent=5 // pred_check_branch
        %367 = sbr.rel (%p364) target = $region52
      $region51: #{tpu_custom_call.1} parent=5 // pred_region
        %s368 = ssub.s32 %s25, 1
        %s369 = sand.u32 %s38, 1
        %s370 = scalar_lea.sflag [#allocation3], %s369
        %s371 = sand.u32 %s38, 1
        %s372 = smul.addr %s371, 8
        %s373 = scalar_lea.vmem [#allocation2], %s372
        // Predicated region
        $region53: #{tpu_custom_call.1} parent=51 // pred_check
          %p374 = pneg %p51
        $region54: #{tpu_custom_call.1} parent=51 // pred_check_branch
          %376 = sbr.rel (%p374) target = $region56
        $region55: #{tpu_custom_call.1} parent=51 // pred_region
          %377 = dma.done %s370, 128
        $region56: #{tpu_custom_call.1} parent=51 // pred_fallthru
          _
        %s378 = sand.u32 %s30, 1
        %s379 = scalar_lea.sflag [#allocation6], %s378
        %s380 = sand.u32 %s64, 1
        %s381 = smul.addr %s380, 8
        %s382 = scalar_lea.vmem [#allocation5], %s381
        // Predicated region
        $region57: #{tpu_custom_call.1} parent=51 // pred_check
          %p383 = pneg %p77
        $region58: #{tpu_custom_call.1} parent=51 // pred_check_branch
          %385 = sbr.rel (%p383) target = $region60
        $region59: #{tpu_custom_call.1} parent=51 // pred_region
          %386 = dma.done %s379, 128
        $region60: #{tpu_custom_call.1} parent=51 // pred_fallthru
          _
        %s387 = sand.u32 %s30, 1
        %s388 = scalar_lea.sflag [#allocation6], %s387
        %s389 = sand.u32 %s90, 1
        %s390 = smul.addr %s389, 8
        %s391 = scalar_lea.vmem [#allocation7], %s390
        // Predicated region
        $region61: #{tpu_custom_call.1} parent=51 // pred_check
          %p392 = pneg %p103
        $region62: #{tpu_custom_call.1} parent=51 // pred_check_branch
          %394 = sbr.rel (%p392) target = $region64
        $region63: #{tpu_custom_call.1} parent=51 // pred_region
          %395 = dma.done %s388, 128
        $region64: #{tpu_custom_call.1} parent=51 // pred_fallthru
          _
        // Predicated region
        $region65: #{tpu_custom_call.1} parent=51 // pred_check
          %p396 = pneg %p124
        $region66: #{tpu_custom_call.1} parent=51 // pred_check_branch
          %398 = sbr.rel (%p396) target = $region68
        $region67: #{tpu_custom_call.1} parent=51 // pred_region
          %399 = dma.done [#allocation9], 512
        $region68: #{tpu_custom_call.1} parent=51 // pred_fallthru
          _
        // Predicated region
        $region69: #{tpu_custom_call.1} parent=51 // pred_check
          %p400 = pneg %p145
        $region70: #{tpu_custom_call.1} parent=51 // pred_check_branch
          %402 = sbr.rel (%p400) target = $region72
        $region71: #{tpu_custom_call.1} parent=51 // pred_region
          %403 = dma.done [#allocation9], 512
        $region72: #{tpu_custom_call.1} parent=51 // pred_fallthru
          _
        // Predicated region
        $region73: #{tpu_custom_call.1} parent=51 // pred_check
          %p404 = pneg %p166
        $region74: #{tpu_custom_call.1} parent=51 // pred_check_branch
          %406 = sbr.rel (%p404) target = $region76
        $region75: #{tpu_custom_call.1} parent=51 // pred_region
          %407 = dma.done [#allocation12], 512
        $region76: #{tpu_custom_call.1} parent=51 // pred_fallthru
          _
        // Predicated region
        $region77: #{tpu_custom_call.1} parent=51 // pred_check
          %p408 = pneg %p187
        $region78: #{tpu_custom_call.1} parent=51 // pred_check_branch
          %410 = sbr.rel (%p408) target = $region80
        $region79: #{tpu_custom_call.1} parent=51 // pred_region
          %411 = dma.done [#allocation12], 512
        $region80: #{tpu_custom_call.1} parent=51 // pred_fallthru
          _
        %s412 = sand.u32 %s38, 1
        %s413 = scalar_lea.sflag [#allocation3], %s412
        %s414 = sand.u32 %s38, 1
        %s415 = smul.addr %s414, 8
        %s416 = scalar_lea.vmem [#allocation2], %s415
        %p417 = pneg %p51
        %p418 = pneg %p48
        %s419 = sand.u32 %s30, 1
        %s420 = scalar_lea.sflag [#allocation6], %s419
        %s421 = sand.u32 %s64, 1
        %s422 = smul.addr %s421, 8
        %s423 = scalar_lea.vmem [#allocation5], %s422
        %p424 = pneg %p77
        %p425 = pneg %p74
        %s426 = sand.u32 %s30, 1
        %s427 = scalar_lea.sflag [#allocation6], %s426
        %s428 = sand.u32 %s90, 1
        %s429 = smul.addr %s428, 8
        %s430 = scalar_lea.vmem [#allocation7], %s429
        %p431 = pneg %p103
        %p432 = pneg %p100
        %p433 = pneg %p124
        %p434 = pneg %p121
        %p435 = pneg %p145
        %p436 = pneg %p142
        %p437 = pneg %p166
        %p438 = pneg %p163
        %p439 = pneg %p187
        %p440 = pneg %p184
        %p441 = pneg %p208
        %p442 = pneg %p205
        %p443 = pneg %p234
        %p444 = pneg %p231
        %s445 = sand.u32 %s221, 1
        %s446 = scalar_lea.sflag [#allocation4], %s445
        %s447 = sand.u32 %s221, 1
        %s448 = smul.addr %s447, 8
        %s449 = scalar_lea.vmem [#allocation14], %s448
        %v450 = vld [vmem:[%s373] sm:$0xff]
        %v451 = vld [vmem:[%s382] sm:$0xff]
        %v452 = vld [vmem:[%s391] sm:$0xff]
        %v453 = vld [vmem:[#allocation8] sm:$0xff]
        %v454 = vld [vmem:[#allocation8 + $0x8] sm:$0xff]
        %v455 = vld [vmem:[#allocation8 + $0x10] sm:$0xff]
        %v456 = vld [vmem:[#allocation8 + $0x18] sm:$0xff]
        %vm457 = vcmask 261120
        %v459 = vsel %vm457, %v450, 0
        %461 = vmatprep.subr.mxu0 0.0
        %462 = vmatpush1.msra.mxu0 %v453
        %463 = vmatprep.subr.mxu0 0.0
        %464 = vmatpush1.msra.mxu0 %v454
        %465 = vmatprep.subr.mxu0 0.0
        %466 = vmatpush1.msra.mxu0 %v455
        %467 = vmatprep.subr.mxu0 0.0
        %468 = vmatpush1.msra.mxu0 %v456
        %469 = vmatprep.subr.mxu0 0.0
        %470 = vmatpush1.msra.mxu0 0.0
        %471 = vmatprep.subr.mxu0 0.0
        %472 = vmatpush1.msra.mxu0 0.0
        %473 = vmatprep.subr.mxu0 0.0
        %474 = vmatpush1.msra.mxu0 0.0
        %475 = vmatprep.subr.mxu0 0.0
        %476 = vmatpush1.msra.mxu0 0.0
        %477 = vmatprep.subr.mxu0 0.0
        %478 = vmatpush1.msra.mxu0 0.0
        %479 = vmatprep.subr.mxu0 0.0
        %480 = vmatpush1.msra.mxu0 0.0
        %481 = vmatprep.subr.mxu0 0.0
        %482 = vmatpush1.msra.mxu0 0.0
        %483 = vmatprep.subr.mxu0 0.0
        %484 = vmatpush1.msra.mxu0 0.0
        %485 = vmatprep.subr.mxu0 0.0
        %486 = vmatpush1.msra.mxu0 0.0
        %487 = vmatprep.subr.mxu0 0.0
        %488 = vmatpush1.msra.mxu0 0.0
        %489 = vmatprep.subr.mxu0 0.0
        %490 = vmatpush1.msra.mxu0 0.0
        %491 = vmatprep.subr.mxu0 0.0
        %492 = vmatpush1.msra.mxu0 0.0
        %493 = vmatprep.subr.mxu0 0.0
        %494 = vmatpush1.msra.mxu0 0.0
        %495 = vmatprep.subr.mxu0 0.0
        %496 = vmatpush1.msra.mxu0 0.0
        %497 = vmatprep.subr.mxu0 0.0
        %498 = vmatpush1.msra.mxu0 0.0
        %499 = vmatprep.subr.mxu0 0.0
        %500 = vmatpush1.msra.mxu0 0.0
        %501 = vmatprep.subr.mxu0 0.0
        %502 = vmatpush1.msra.mxu0 0.0
        %503 = vmatprep.subr.mxu0 0.0
        %504 = vmatpush1.msra.mxu0 0.0
        %505 = vmatprep.subr.mxu0 0.0
        %506 = vmatpush1.msra.mxu0 0.0
        %507 = vmatprep.subr.mxu0 0.0
        %508 = vmatpush1.msra.mxu0 0.0
        %509 = vmatprep.subr.mxu0 0.0
        %510 = vmatpush1.msra.mxu0 0.0
        %511 = vmatprep.subr.mxu0 0.0
        %512 = vmatpush1.msra.mxu0 0.0
        %513 = vmatprep.subr.mxu0 0.0
        %514 = vmatpush1.msra.mxu0 0.0
        %515 = vmatprep.subr.mxu0 0.0
        %516 = vmatpush1.msra.mxu0 0.0
        %517 = vmatprep.subr.mxu0 0.0
        %518 = vmatpush1.msra.mxu0 0.0
        %519 = vmatprep.subr.mxu0 0.0
        %520 = vmatpush1.msra.mxu0 0.0
        %521 = vmatprep.subr.mxu0 0.0
        %522 = vmatpush1.msra.mxu0 0.0
        %523 = vmatprep.subr.mxu0 0.0
        %524 = vmatpush1.msra.mxu0 0.0
        %525 = vmatprep.mubr.f32.mxu0 0.0
        %526 = vmatmul.mubr.f32.gmra.mrb[0].mxu0 %v459
        %v527 = vpop.f32.mrb[0].mxu0
        %v528 = vadd.f32 0.0, %v527
        %v529 = vpop.f32.mrb[0].mxu0
        %530 = vdwg.mxu0
        %v531 = vld [vmem:[#allocation10] sm:$0xff]
        %v532 = vld [vmem:[#allocation10 + $0x8] sm:$0xff]
        %v533 = vld [vmem:[#allocation10 + $0x10] sm:$0xff]
        %v534 = vld [vmem:[#allocation10 + $0x18] sm:$0xff]
        %v536 = vsel %vm457, %v451, 0
        %538 = vmatprep.subr.mxu0 0.0
        %539 = vmatpush1.msra.mxu0 %v531
        %540 = vmatprep.subr.mxu0 0.0
        %541 = vmatpush1.msra.mxu0 %v532
        %542 = vmatprep.subr.mxu0 0.0
        %543 = vmatpush1.msra.mxu0 %v533
        %544 = vmatprep.subr.mxu0 0.0
        %545 = vmatpush1.msra.mxu0 %v534
        %546 = vmatprep.subr.mxu0 0.0
        %547 = vmatpush1.msra.mxu0 0.0
        %548 = vmatprep.subr.mxu0 0.0
        %549 = vmatpush1.msra.mxu0 0.0
        %550 = vmatprep.subr.mxu0 0.0
        %551 = vmatpush1.msra.mxu0 0.0
        %552 = vmatprep.subr.mxu0 0.0
        %553 = vmatpush1.msra.mxu0 0.0
        %554 = vmatprep.subr.mxu0 0.0
        %555 = vmatpush1.msra.mxu0 0.0
        %556 = vmatprep.subr.mxu0 0.0
        %557 = vmatpush1.msra.mxu0 0.0
        %558 = vmatprep.subr.mxu0 0.0
        %559 = vmatpush1.msra.mxu0 0.0
        %560 = vmatprep.subr.mxu0 0.0
        %561 = vmatpush1.msra.mxu0 0.0
        %562 = vmatprep.subr.mxu0 0.0
        %563 = vmatpush1.msra.mxu0 0.0
        %564 = vmatprep.subr.mxu0 0.0
        %565 = vmatpush1.msra.mxu0 0.0
        %566 = vmatprep.subr.mxu0 0.0
        %567 = vmatpush1.msra.mxu0 0.0
        %568 = vmatprep.subr.mxu0 0.0
        %569 = vmatpush1.msra.mxu0 0.0
        %570 = vmatprep.subr.mxu0 0.0
        %571 = vmatpush1.msra.mxu0 0.0
        %572 = vmatprep.subr.mxu0 0.0
        %573 = vmatpush1.msra.mxu0 0.0
        %574 = vmatprep.subr.mxu0 0.0
        %575 = vmatpush1.msra.mxu0 0.0
        %576 = vmatprep.subr.mxu0 0.0
        %577 = vmatpush1.msra.mxu0 0.0
        %578 = vmatprep.subr.mxu0 0.0
        %579 = vmatpush1.msra.mxu0 0.0
        %580 = vmatprep.subr.mxu0 0.0
        %581 = vmatpush1.msra.mxu0 0.0
        %582 = vmatprep.subr.mxu0 0.0
        %583 = vmatpush1.msra.mxu0 0.0
        %584 = vmatprep.subr.mxu0 0.0
        %585 = vmatpush1.msra.mxu0 0.0
        %586 = vmatprep.subr.mxu0 0.0
        %587 = vmatpush1.msra.mxu0 0.0
        %588 = vmatprep.subr.mxu0 0.0
        %589 = vmatpush1.msra.mxu0 0.0
        %590 = vmatprep.subr.mxu0 0.0
        %591 = vmatpush1.msra.mxu0 0.0
        %592 = vmatprep.subr.mxu0 0.0
        %593 = vmatpush1.msra.mxu0 0.0
        %594 = vmatprep.subr.mxu0 0.0
        %595 = vmatpush1.msra.mxu0 0.0
        %596 = vmatprep.subr.mxu0 0.0
        %597 = vmatpush1.msra.mxu0 0.0
        %598 = vmatprep.subr.mxu0 0.0
        %599 = vmatpush1.msra.mxu0 0.0
        %600 = vmatprep.subr.mxu0 0.0
        %601 = vmatpush1.msra.mxu0 0.0
        %602 = vmatprep.mubr.f32.mxu0 0.0
        %603 = vmatmul.mubr.f32.gmra.mrb[0].mxu0 %v536
        %v604 = vpop.f32.mrb[0].mxu0
        %v605 = vadd.f32 0.0, %v604
        %v606 = vpop.f32.mrb[0].mxu0
        %607 = vdwg.mxu0
        %v608 = vld [vmem:[#allocation11] sm:$0xff]
        %v609 = vld [vmem:[#allocation11 + $0x8] sm:$0xff]
        %v610 = vld [vmem:[#allocation11 + $0x10] sm:$0xff]
        %v611 = vld [vmem:[#allocation11 + $0x18] sm:$0xff]
        %v613 = vsel %vm457, %v452, 0
        %615 = vmatprep.subr.mxu0 0.0
        %616 = vmatpush1.msra.mxu0 %v608
        %617 = vmatprep.subr.mxu0 0.0
        %618 = vmatpush1.msra.mxu0 %v609
        %619 = vmatprep.subr.mxu0 0.0
        %620 = vmatpush1.msra.mxu0 %v610
        %621 = vmatprep.subr.mxu0 0.0
        %622 = vmatpush1.msra.mxu0 %v611
        %623 = vmatprep.subr.mxu0 0.0
        %624 = vmatpush1.msra.mxu0 0.0
        %625 = vmatprep.subr.mxu0 0.0
        %626 = vmatpush1.msra.mxu0 0.0
        %627 = vmatprep.subr.mxu0 0.0
        %628 = vmatpush1.msra.mxu0 0.0
        %629 = vmatprep.subr.mxu0 0.0
        %630 = vmatpush1.msra.mxu0 0.0
        %631 = vmatprep.subr.mxu0 0.0
        %632 = vmatpush1.msra.mxu0 0.0
        %633 = vmatprep.subr.mxu0 0.0
        %634 = vmatpush1.msra.mxu0 0.0
        %635 = vmatprep.subr.mxu0 0.0
        %636 = vmatpush1.msra.mxu0 0.0
        %637 = vmatprep.subr.mxu0 0.0
        %638 = vmatpush1.msra.mxu0 0.0
        %639 = vmatprep.subr.mxu0 0.0
        %640 = vmatpush1.msra.mxu0 0.0
        %641 = vmatprep.subr.mxu0 0.0
        %642 = vmatpush1.msra.mxu0 0.0
        %643 = vmatprep.subr.mxu0 0.0
        %644 = vmatpush1.msra.mxu0 0.0
        %645 = vmatprep.subr.mxu0 0.0
        %646 = vmatpush1.msra.mxu0 0.0
        %647 = vmatprep.subr.mxu0 0.0
        %648 = vmatpush1.msra.mxu0 0.0
        %649 = vmatprep.subr.mxu0 0.0
        %650 = vmatpush1.msra.mxu0 0.0
        %651 = vmatprep.subr.mxu0 0.0
        %652 = vmatpush1.msra.mxu0 0.0
        %653 = vmatprep.subr.mxu0 0.0
        %654 = vmatpush1.msra.mxu0 0.0
        %655 = vmatprep.subr.mxu0 0.0
        %656 = vmatpush1.msra.mxu0 0.0
        %657 = vmatprep.subr.mxu0 0.0
        %658 = vmatpush1.msra.mxu0 0.0
        %659 = vmatprep.subr.mxu0 0.0
        %660 = vmatpush1.msra.mxu0 0.0
        %661 = vmatprep.subr.mxu0 0.0
        %662 = vmatpush1.msra.mxu0 0.0
        %663 = vmatprep.subr.mxu0 0.0
        %664 = vmatpush1.msra.mxu0 0.0
        %665 = vmatprep.subr.mxu0 0.0
        %666 = vmatpush1.msra.mxu0 0.0
        %667 = vmatprep.subr.mxu0 0.0
        %668 = vmatpush1.msra.mxu0 0.0
        %669 = vmatprep.subr.mxu0 0.0
        %670 = vmatpush1.msra.mxu0 0.0
        %671 = vmatprep.subr.mxu0 0.0
        %672 = vmatpush1.msra.mxu0 0.0
        %673 = vmatprep.subr.mxu0 0.0
        %674 = vmatpush1.msra.mxu0 0.0
        %675 = vmatprep.subr.mxu0 0.0
        %676 = vmatpush1.msra.mxu0 0.0
        %677 = vmatprep.subr.mxu0 0.0
        %678 = vmatpush1.msra.mxu0 0.0
        %679 = vmatprep.mubr.f32.mxu0 0.0
        %680 = vmatmul.mubr.f32.gmra.mrb[0].mxu0 %v613
        %v681 = vpop.f32.mrb[0].mxu0
        %v682 = vadd.f32 0.0, %v681
        %v683 = vpop.f32.mrb[0].mxu0
        %684 = vdwg.mxu0
        %686 = vrot.lane.b32.xlu0 %v528, 120
        %v687 = vpop.permute.xlu0 %686
        %689 = vrot.lane.b32.xlu0 %v528, 112
        %v690 = vpop.permute.xlu0 %689
        %692 = vrot.lane.b32.xlu0 %v528, 104
        %v693 = vpop.permute.xlu0 %692
        %v695 = vcombine.low %v528, %v690
        %v696 = vcombine.high %v528, %v690
        %v698 = vunpack.c.l.s4 1983009808
        %v699 = vunpack.c.0.s8 %v698
        %v700 = vlaneseq
        %v701 = vshrl.u32 %v700, 7
        %v702 = vsub.s32 %v699, %v701
        %v703 = vrot.slane %v695, %v702
        %v705 = vunpack.c.l.s4 1983009808
        %v706 = vunpack.c.0.s8 %v705
        %v707 = vlaneseq
        %v708 = vshrl.u32 %v707, 7
        %v709 = vsub.s32 %v706, %v708
        %v710 = vrot.slane %v696, %v709
        %v711 = vcombine.low %v687, %v693
        %v712 = vcombine.high %v687, %v693
        %v714 = vunpack.c.l.s4 1983009808
        %v715 = vunpack.c.0.s8 %v714
        %v716 = vlaneseq
        %v717 = vshrl.u32 %v716, 7
        %v718 = vsub.s32 %v715, %v717
        %v719 = vrot.slane %v711, %v718
        %v721 = vunpack.c.l.s4 1983009808
        %v722 = vunpack.c.0.s8 %v721
        %v723 = vlaneseq
        %v724 = vshrl.u32 %v723, 7
        %v725 = vsub.s32 %v722, %v724
        %v726 = vrot.slane %v712, %v725
        %v727 = vcombine.low %v703, %v719
        %v728 = vcombine.high %v703, %v719
        %v730 = vunpack.c.l.s4 1934713408
        %v731 = vunpack.c.0.s8 %v730
        %v732 = vlaneseq
        %v733 = vshrl.u32 %v732, 7
        %v734 = vsub.s32 %v731, %v733
        %v735 = vrot.slane %v727, %v734
        %v737 = vunpack.c.l.s4 1934713408
        %v738 = vunpack.c.0.s8 %v737
        %v739 = vlaneseq
        %v740 = vshrl.u32 %v739, 7
        %v741 = vsub.s32 %v738, %v740
        %v742 = vrot.slane %v728, %v741
        %v743 = vcombine.low %v710, %v726
        %v744 = vcombine.high %v710, %v726
        %v746 = vunpack.c.l.s4 1934713408
        %v747 = vunpack.c.0.s8 %v746
        %v748 = vlaneseq
        %v749 = vshrl.u32 %v748, 7
        %v750 = vsub.s32 %v747, %v749
        %v751 = vrot.slane %v743, %v750
        %v753 = vunpack.c.l.s4 1934713408
        %v754 = vunpack.c.0.s8 %v753
        %v755 = vlaneseq
        %v756 = vshrl.u32 %v755, 7
        %v757 = vsub.s32 %v754, %v756
        %v758 = vrot.slane %v744, %v757
        %v759 = vcombine.high %v735, 0.0
        %v760 = vcombine.high %v742, 0.0
        %v761 = vcombine.high %v751, 0.0
        %v762 = vcombine.high %v758, 0.0
        %v763 = vcombine.low %v735, %v742
        %v765 = vunpack.c.l.s4 1983009808
        %v766 = vunpack.c.0.s8 %v765
        %v767 = vlaneseq
        %v768 = vshrl.u32 %v767, 7
        %v769 = vsub.s32 %v766, %v768
        %v770 = vrot.slane %v763, %v769
        %v771 = vcombine.low %v759, %v760
        %v773 = vunpack.c.l.s4 1983009808
        %v774 = vunpack.c.0.s8 %v773
        %v775 = vlaneseq
        %v776 = vshrl.u32 %v775, 7
        %v777 = vsub.s32 %v774, %v776
        %v778 = vrot.slane %v771, %v777
        %v779 = vcombine.low %v751, %v758
        %v781 = vunpack.c.l.s4 1983009808
        %v782 = vunpack.c.0.s8 %v781
        %v783 = vlaneseq
        %v784 = vshrl.u32 %v783, 7
        %v785 = vsub.s32 %v782, %v784
        %v786 = vrot.slane %v779, %v785
        %v787 = vcombine.low %v761, %v762
        %v789 = vunpack.c.l.s4 1983009808
        %v790 = vunpack.c.0.s8 %v789
        %v791 = vlaneseq
        %v792 = vshrl.u32 %v791, 7
        %v793 = vsub.s32 %v790, %v792
        %v794 = vrot.slane %v787, %v793
        %v795 = vcombine.low %v770, %v778
        %v796 = vcombine.high %v770, %v778
        %v798 = vunpack.c.l.s4 1934713408
        %v799 = vunpack.c.0.s8 %v798
        %v800 = vlaneseq
        %v801 = vshrl.u32 %v800, 7
        %v802 = vsub.s32 %v799, %v801
        %v803 = vrot.slane %v795, %v802
        %v805 = vunpack.c.l.s4 1934713408
        %v806 = vunpack.c.0.s8 %v805
        %v807 = vlaneseq
        %v808 = vshrl.u32 %v807, 7
        %v809 = vsub.s32 %v806, %v808
        %v810 = vrot.slane %v796, %v809
        %v811 = vcombine.low %v786, %v794
        %v812 = vcombine.high %v786, %v794
        %v814 = vunpack.c.l.s4 1934713408
        %v815 = vunpack.c.0.s8 %v814
        %v816 = vlaneseq
        %v817 = vshrl.u32 %v816, 7
        %v818 = vsub.s32 %v815, %v817
        %v819 = vrot.slane %v811, %v818
        %v821 = vunpack.c.l.s4 1934713408
        %v822 = vunpack.c.0.s8 %v821
        %v823 = vlaneseq
        %v824 = vshrl.u32 %v823, 7
        %v825 = vsub.s32 %v822, %v824
        %v826 = vrot.slane %v812, %v825
        %v827 = vcombine.low %v803, %v819
        %v828 = vcombine.high %v803, %v819
        %v829 = vcombine.low %v810, %v826
        %v830 = vcombine.high %v810, %v826
        %832 = vrot.lane.b32.xlu0 %v605, 120
        %v833 = vpop.permute.xlu0 %832
        %835 = vrot.lane.b32.xlu0 %v605, 112
        %v836 = vpop.permute.xlu0 %835
        %838 = vrot.lane.b32.xlu0 %v605, 104
        %v839 = vpop.permute.xlu0 %838
        %v841 = vcombine.low %v605, %v836
        %v842 = vcombine.high %v605, %v836
        %v844 = vunpack.c.l.s4 1983009808
        %v845 = vunpack.c.0.s8 %v844
        %v846 = vlaneseq
        %v847 = vshrl.u32 %v846, 7
        %v848 = vsub.s32 %v845, %v847
        %v849 = vrot.slane %v841, %v848
        %v851 = vunpack.c.l.s4 1983009808
        %v852 = vunpack.c.0.s8 %v851
        %v853 = vlaneseq
        %v854 = vshrl.u32 %v853, 7
        %v855 = vsub.s32 %v852, %v854
        %v856 = vrot.slane %v842, %v855
        %v857 = vcombine.low %v833, %v839
        %v858 = vcombine.high %v833, %v839
        %v860 = vunpack.c.l.s4 1983009808
        %v861 = vunpack.c.0.s8 %v860
        %v862 = vlaneseq
        %v863 = vshrl.u32 %v862, 7
        %v864 = vsub.s32 %v861, %v863
        %v865 = vrot.slane %v857, %v864
        %v867 = vunpack.c.l.s4 1983009808
        %v868 = vunpack.c.0.s8 %v867
        %v869 = vlaneseq
        %v870 = vshrl.u32 %v869, 7
        %v871 = vsub.s32 %v868, %v870
        %v872 = vrot.slane %v858, %v871
        %v873 = vcombine.low %v849, %v865
        %v874 = vcombine.high %v849, %v865
        %v876 = vunpack.c.l.s4 1934713408
        %v877 = vunpack.c.0.s8 %v876
        %v878 = vlaneseq
        %v879 = vshrl.u32 %v878, 7
        %v880 = vsub.s32 %v877, %v879
        %v881 = vrot.slane %v873, %v880
        %v883 = vunpack.c.l.s4 1934713408
        %v884 = vunpack.c.0.s8 %v883
        %v885 = vlaneseq
        %v886 = vshrl.u32 %v885, 7
        %v887 = vsub.s32 %v884, %v886
        %v888 = vrot.slane %v874, %v887
        %v889 = vcombine.low %v856, %v872
        %v890 = vcombine.high %v856, %v872
        %v892 = vunpack.c.l.s4 1934713408
        %v893 = vunpack.c.0.s8 %v892
        %v894 = vlaneseq
        %v895 = vshrl.u32 %v894, 7
        %v896 = vsub.s32 %v893, %v895
        %v897 = vrot.slane %v889, %v896
        %v899 = vunpack.c.l.s4 1934713408
        %v900 = vunpack.c.0.s8 %v899
        %v901 = vlaneseq
        %v902 = vshrl.u32 %v901, 7
        %v903 = vsub.s32 %v900, %v902
        %v904 = vrot.slane %v890, %v903
        %v905 = vcombine.high %v881, 0.0
        %v906 = vcombine.high %v888, 0.0
        %v907 = vcombine.high %v897, 0.0
        %v908 = vcombine.high %v904, 0.0
        %v909 = vcombine.low %v881, %v888
        %v911 = vunpack.c.l.s4 1983009808
        %v912 = vunpack.c.0.s8 %v911
        %v913 = vlaneseq
        %v914 = vshrl.u32 %v913, 7
        %v915 = vsub.s32 %v912, %v914
        %v916 = vrot.slane %v909, %v915
        %v917 = vcombine.low %v905, %v906
        %v919 = vunpack.c.l.s4 1983009808
        %v920 = vunpack.c.0.s8 %v919
        %v921 = vlaneseq
        %v922 = vshrl.u32 %v921, 7
        %v923 = vsub.s32 %v920, %v922
        %v924 = vrot.slane %v917, %v923
        %v925 = vcombine.low %v897, %v904
        %v927 = vunpack.c.l.s4 1983009808
        %v928 = vunpack.c.0.s8 %v927
        %v929 = vlaneseq
        %v930 = vshrl.u32 %v929, 7
        %v931 = vsub.s32 %v928, %v930
        %v932 = vrot.slane %v925, %v931
        %v933 = vcombine.low %v907, %v908
        %v935 = vunpack.c.l.s4 1983009808
        %v936 = vunpack.c.0.s8 %v935
        %v937 = vlaneseq
        %v938 = vshrl.u32 %v937, 7
        %v939 = vsub.s32 %v936, %v938
        %v940 = vrot.slane %v933, %v939
        %v941 = vcombine.low %v916, %v924
        %v942 = vcombine.high %v916, %v924
        %v944 = vunpack.c.l.s4 1934713408
        %v945 = vunpack.c.0.s8 %v944
        %v946 = vlaneseq
        %v947 = vshrl.u32 %v946, 7
        %v948 = vsub.s32 %v945, %v947
        %v949 = vrot.slane %v941, %v948
        %v951 = vunpack.c.l.s4 1934713408
        %v952 = vunpack.c.0.s8 %v951
        %v953 = vlaneseq
        %v954 = vshrl.u32 %v953, 7
        %v955 = vsub.s32 %v952, %v954
        %v956 = vrot.slane %v942, %v955
        %v957 = vcombine.low %v932, %v940
        %v958 = vcombine.high %v932, %v940
        %v960 = vunpack.c.l.s4 1934713408
        %v961 = vunpack.c.0.s8 %v960
        %v962 = vlaneseq
        %v963 = vshrl.u32 %v962, 7
        %v964 = vsub.s32 %v961, %v963
        %v965 = vrot.slane %v957, %v964
        %v967 = vunpack.c.l.s4 1934713408
        %v968 = vunpack.c.0.s8 %v967
        %v969 = vlaneseq
        %v970 = vshrl.u32 %v969, 7
        %v971 = vsub.s32 %v968, %v970
        %v972 = vrot.slane %v958, %v971
        %v973 = vcombine.low %v949, %v965
        %v974 = vcombine.high %v949, %v965
        %v975 = vcombine.low %v956, %v972
        %v976 = vcombine.high %v956, %v972
        %978 = vrot.lane.b32.xlu0 %v682, 120
        %v979 = vpop.permute.xlu0 %978
        %981 = vrot.lane.b32.xlu0 %v682, 112
        %v982 = vpop.permute.xlu0 %981
        %984 = vrot.lane.b32.xlu0 %v682, 104
        %v985 = vpop.permute.xlu0 %984
        %v987 = vcombine.low %v682, %v982
        %v988 = vcombine.high %v682, %v982
        %v990 = vunpack.c.l.s4 1983009808
        %v991 = vunpack.c.0.s8 %v990
        %v992 = vlaneseq
        %v993 = vshrl.u32 %v992, 7
        %v994 = vsub.s32 %v991, %v993
        %v995 = vrot.slane %v987, %v994
        %v997 = vunpack.c.l.s4 1983009808
        %v998 = vunpack.c.0.s8 %v997
        %v999 = vlaneseq
        %v1000 = vshrl.u32 %v999, 7
        %v1001 = vsub.s32 %v998, %v1000
        %v1002 = vrot.slane %v988, %v1001
        %v1003 = vcombine.low %v979, %v985
        %v1004 = vcombine.high %v979, %v985
        %v1006 = vunpack.c.l.s4 1983009808
        %v1007 = vunpack.c.0.s8 %v1006
        %v1008 = vlaneseq
        %v1009 = vshrl.u32 %v1008, 7
        %v1010 = vsub.s32 %v1007, %v1009
        %v1011 = vrot.slane %v1003, %v1010
        %v1013 = vunpack.c.l.s4 1983009808
        %v1014 = vunpack.c.0.s8 %v1013
        %v1015 = vlaneseq
        %v1016 = vshrl.u32 %v1015, 7
        %v1017 = vsub.s32 %v1014, %v1016
        %v1018 = vrot.slane %v1004, %v1017
        %v1019 = vcombine.low %v995, %v1011
        %v1020 = vcombine.high %v995, %v1011
        %v1022 = vunpack.c.l.s4 1934713408
        %v1023 = vunpack.c.0.s8 %v1022
        %v1024 = vlaneseq
        %v1025 = vshrl.u32 %v1024, 7
        %v1026 = vsub.s32 %v1023, %v1025
        %v1027 = vrot.slane %v1019, %v1026
        %v1029 = vunpack.c.l.s4 1934713408
        %v1030 = vunpack.c.0.s8 %v1029
        %v1031 = vlaneseq
        %v1032 = vshrl.u32 %v1031, 7
        %v1033 = vsub.s32 %v1030, %v1032
        %v1034 = vrot.slane %v1020, %v1033
        %v1035 = vcombine.low %v1002, %v1018
        %v1036 = vcombine.high %v1002, %v1018
        %v1038 = vunpack.c.l.s4 1934713408
        %v1039 = vunpack.c.0.s8 %v1038
        %v1040 = vlaneseq
        %v1041 = vshrl.u32 %v1040, 7
        %v1042 = vsub.s32 %v1039, %v1041
        %v1043 = vrot.slane %v1035, %v1042
        %v1045 = vunpack.c.l.s4 1934713408
        %v1046 = vunpack.c.0.s8 %v1045
        %v1047 = vlaneseq
        %v1048 = vshrl.u32 %v1047, 7
        %v1049 = vsub.s32 %v1046, %v1048
        %v1050 = vrot.slane %v1036, %v1049
        %v1051 = vcombine.high %v1027, 0.0
        %v1052 = vcombine.high %v1034, 0.0
        %v1053 = vcombine.high %v1043, 0.0
        %v1054 = vcombine.high %v1050, 0.0
        %v1055 = vcombine.low %v1027, %v1034
        %v1057 = vunpack.c.l.s4 1983009808
        %v1058 = vunpack.c.0.s8 %v1057
        %v1059 = vlaneseq
        %v1060 = vshrl.u32 %v1059, 7
        %v1061 = vsub.s32 %v1058, %v1060
        %v1062 = vrot.slane %v1055, %v1061
        %v1063 = vcombine.low %v1051, %v1052
        %v1065 = vunpack.c.l.s4 1983009808
        %v1066 = vunpack.c.0.s8 %v1065
        %v1067 = vlaneseq
        %v1068 = vshrl.u32 %v1067, 7
        %v1069 = vsub.s32 %v1066, %v1068
        %v1070 = vrot.slane %v1063, %v1069
        %v1071 = vcombine.low %v1043, %v1050
        %v1073 = vunpack.c.l.s4 1983009808
        %v1074 = vunpack.c.0.s8 %v1073
        %v1075 = vlaneseq
        %v1076 = vshrl.u32 %v1075, 7
        %v1077 = vsub.s32 %v1074, %v1076
        %v1078 = vrot.slane %v1071, %v1077
        %v1079 = vcombine.low %v1053, %v1054
        %v1081 = vunpack.c.l.s4 1983009808
        %v1082 = vunpack.c.0.s8 %v1081
        %v1083 = vlaneseq
        %v1084 = vshrl.u32 %v1083, 7
        %v1085 = vsub.s32 %v1082, %v1084
        %v1086 = vrot.slane %v1079, %v1085
        %v1087 = vcombine.low %v1062, %v1070
        %v1088 = vcombine.high %v1062, %v1070
        %v1090 = vunpack.c.l.s4 1934713408
        %v1091 = vunpack.c.0.s8 %v1090
        %v1092 = vlaneseq
        %v1093 = vshrl.u32 %v1092, 7
        %v1094 = vsub.s32 %v1091, %v1093
        %v1095 = vrot.slane %v1087, %v1094
        %v1097 = vunpack.c.l.s4 1934713408
        %v1098 = vunpack.c.0.s8 %v1097
        %v1099 = vlaneseq
        %v1100 = vshrl.u32 %v1099, 7
        %v1101 = vsub.s32 %v1098, %v1100
        %v1102 = vrot.slane %v1088, %v1101
        %v1103 = vcombine.low %v1078, %v1086
        %v1104 = vcombine.high %v1078, %v1086
        %v1106 = vunpack.c.l.s4 1934713408
        %v1107 = vunpack.c.0.s8 %v1106
        %v1108 = vlaneseq
        %v1109 = vshrl.u32 %v1108, 7
        %v1110 = vsub.s32 %v1107, %v1109
        %v1111 = vrot.slane %v1103, %v1110
        %v1113 = vunpack.c.l.s4 1934713408
        %v1114 = vunpack.c.0.s8 %v1113
        %v1115 = vlaneseq
        %v1116 = vshrl.u32 %v1115, 7
        %v1117 = vsub.s32 %v1114, %v1116
        %v1118 = vrot.slane %v1104, %v1117
        %v1119 = vcombine.low %v1095, %v1111
        %v1120 = vcombine.high %v1095, %v1111
        %v1121 = vcombine.low %v1102, %v1118
        %v1122 = vcombine.high %v1102, %v1118
        %vm1123 = vcmask 64512
        %v1125 = vsel %vm1123, %v827, 0
        %v1128 = vsel %vm1123, %v973, 0
        %1130 = vmatprep.subr.mxu0 0.0
        %1131 = vmatpush1.xpose.msra.mxu0 %v1128
        %1132 = vmatprep.subr.mxu0 0.0
        %1133 = vmatpush1.xpose.msra.mxu0 0.0
        %1134 = vmatprep.subr.mxu0 0.0
        %1135 = vmatpush1.xpose.msra.mxu0 0.0
        %1136 = vmatprep.subr.mxu0 0.0
        %1137 = vmatpush1.xpose.msra.mxu0 0.0
        %1138 = vmatprep.subr.mxu0 0.0
        %1139 = vmatpush1.xpose.msra.mxu0 0.0
        %1140 = vmatprep.subr.mxu0 0.0
        %1141 = vmatpush1.xpose.msra.mxu0 0.0
        %1142 = vmatprep.subr.mxu0 0.0
        %1143 = vmatpush1.xpose.msra.mxu0 0.0
        %1144 = vmatprep.subr.mxu0 0.0
        %1145 = vmatpush1.xpose.msra.mxu0 0.0
        %1146 = vmatprep.subr.mxu0 0.0
        %1147 = vmatpush1.xpose.msra.mxu0 0.0
        %1148 = vmatprep.subr.mxu0 0.0
        %1149 = vmatpush1.xpose.msra.mxu0 0.0
        %1150 = vmatprep.subr.mxu0 0.0
        %1151 = vmatpush1.xpose.msra.mxu0 0.0
        %1152 = vmatprep.subr.mxu0 0.0
        %1153 = vmatpush1.xpose.msra.mxu0 0.0
        %1154 = vmatprep.subr.mxu0 0.0
        %1155 = vmatpush1.xpose.msra.mxu0 0.0
        %1156 = vmatprep.subr.mxu0 0.0
        %1157 = vmatpush1.xpose.msra.mxu0 0.0
        %1158 = vmatprep.subr.mxu0 0.0
        %1159 = vmatpush1.xpose.msra.mxu0 0.0
        %1160 = vmatprep.subr.mxu0 0.0
        %1161 = vmatpush1.xpose.msra.mxu0 0.0
        %1162 = vmatprep.subr.mxu0 0.0
        %1163 = vmatpush1.xpose.msra.mxu0 0.0
        %1164 = vmatprep.subr.mxu0 0.0
        %1165 = vmatpush1.xpose.msra.mxu0 0.0
        %1166 = vmatprep.subr.mxu0 0.0
        %1167 = vmatpush1.xpose.msra.mxu0 0.0
        %1168 = vmatprep.subr.mxu0 0.0
        %1169 = vmatpush1.xpose.msra.mxu0 0.0
        %1170 = vmatprep.subr.mxu0 0.0
        %1171 = vmatpush1.xpose.msra.mxu0 0.0
        %1172 = vmatprep.subr.mxu0 0.0
        %1173 = vmatpush1.xpose.msra.mxu0 0.0
        %1174 = vmatprep.subr.mxu0 0.0
        %1175 = vmatpush1.xpose.msra.mxu0 0.0
        %1176 = vmatprep.subr.mxu0 0.0
        %1177 = vmatpush1.xpose.msra.mxu0 0.0
        %1178 = vmatprep.subr.mxu0 0.0
        %1179 = vmatpush1.xpose.msra.mxu0 0.0
        %1180 = vmatprep.subr.mxu0 0.0
        %1181 = vmatpush1.xpose.msra.mxu0 0.0
        %1182 = vmatprep.subr.mxu0 0.0
        %1183 = vmatpush1.xpose.msra.mxu0 0.0
        %1184 = vmatprep.subr.mxu0 0.0
        %1185 = vmatpush1.xpose.msra.mxu0 0.0
        %1186 = vmatprep.subr.mxu0 0.0
        %1187 = vmatpush1.xpose.msra.mxu0 0.0
        %1188 = vmatprep.subr.mxu0 0.0
        %1189 = vmatpush1.xpose.msra.mxu0 0.0
        %1190 = vmatprep.subr.mxu0 0.0
        %1191 = vmatpush1.xpose.msra.mxu0 0.0
        %1192 = vmatprep.subr.mxu0 0.0
        %1193 = vmatpush1.xpose.msra.mxu0 0.0
        %1194 = vmatprep.mubr.f32.mxu0 0.0
        %1195 = vmatmul.mubr.f32.gmra.mrb[0].mxu0 %v1125
        %v1196 = vpop.f32.mrb[0].mxu0
        %v1197 = vadd.f32 0.0, %v1196
        %v1198 = vpop.f32.mrb[0].mxu0
        %1199 = vdwg.mxu0
        %v1201 = vsel %vm1123, %v828, 0
        %v1204 = vsel %vm1123, %v974, 0
        %1206 = vmatprep.subr.mxu0 0.0
        %1207 = vmatpush1.xpose.msra.mxu0 %v1204
        %1208 = vmatprep.subr.mxu0 0.0
        %1209 = vmatpush1.xpose.msra.mxu0 0.0
        %1210 = vmatprep.subr.mxu0 0.0
        %1211 = vmatpush1.xpose.msra.mxu0 0.0
        %1212 = vmatprep.subr.mxu0 0.0
        %1213 = vmatpush1.xpose.msra.mxu0 0.0
        %1214 = vmatprep.subr.mxu0 0.0
        %1215 = vmatpush1.xpose.msra.mxu0 0.0
        %1216 = vmatprep.subr.mxu0 0.0
        %1217 = vmatpush1.xpose.msra.mxu0 0.0
        %1218 = vmatprep.subr.mxu0 0.0
        %1219 = vmatpush1.xpose.msra.mxu0 0.0
        %1220 = vmatprep.subr.mxu0 0.0
        %1221 = vmatpush1.xpose.msra.mxu0 0.0
        %1222 = vmatprep.subr.mxu0 0.0
        %1223 = vmatpush1.xpose.msra.mxu0 0.0
        %1224 = vmatprep.subr.mxu0 0.0
        %1225 = vmatpush1.xpose.msra.mxu0 0.0
        %1226 = vmatprep.subr.mxu0 0.0
        %1227 = vmatpush1.xpose.msra.mxu0 0.0
        %1228 = vmatprep.subr.mxu0 0.0
        %1229 = vmatpush1.xpose.msra.mxu0 0.0
        %1230 = vmatprep.subr.mxu0 0.0
        %1231 = vmatpush1.xpose.msra.mxu0 0.0
        %1232 = vmatprep.subr.mxu0 0.0
        %1233 = vmatpush1.xpose.msra.mxu0 0.0
        %1234 = vmatprep.subr.mxu0 0.0
        %1235 = vmatpush1.xpose.msra.mxu0 0.0
        %1236 = vmatprep.subr.mxu0 0.0
        %1237 = vmatpush1.xpose.msra.mxu0 0.0
        %1238 = vmatprep.subr.mxu0 0.0
        %1239 = vmatpush1.xpose.msra.mxu0 0.0
        %1240 = vmatprep.subr.mxu0 0.0
        %1241 = vmatpush1.xpose.msra.mxu0 0.0
        %1242 = vmatprep.subr.mxu0 0.0
        %1243 = vmatpush1.xpose.msra.mxu0 0.0
        %1244 = vmatprep.subr.mxu0 0.0
        %1245 = vmatpush1.xpose.msra.mxu0 0.0
        %1246 = vmatprep.subr.mxu0 0.0
        %1247 = vmatpush1.xpose.msra.mxu0 0.0
        %1248 = vmatprep.subr.mxu0 0.0
        %1249 = vmatpush1.xpose.msra.mxu0 0.0
        %1250 = vmatprep.subr.mxu0 0.0
        %1251 = vmatpush1.xpose.msra.mxu0 0.0
        %1252 = vmatprep.subr.mxu0 0.0
        %1253 = vmatpush1.xpose.msra.mxu0 0.0
        %1254 = vmatprep.subr.mxu0 0.0
        %1255 = vmatpush1.xpose.msra.mxu0 0.0
        %1256 = vmatprep.subr.mxu0 0.0
        %1257 = vmatpush1.xpose.msra.mxu0 0.0
        %1258 = vmatprep.subr.mxu0 0.0
        %1259 = vmatpush1.xpose.msra.mxu0 0.0
        %1260 = vmatprep.subr.mxu0 0.0
        %1261 = vmatpush1.xpose.msra.mxu0 0.0
        %1262 = vmatprep.subr.mxu0 0.0
        %1263 = vmatpush1.xpose.msra.mxu0 0.0
        %1264 = vmatprep.subr.mxu0 0.0
        %1265 = vmatpush1.xpose.msra.mxu0 0.0
        %1266 = vmatprep.subr.mxu0 0.0
        %1267 = vmatpush1.xpose.msra.mxu0 0.0
        %1268 = vmatprep.subr.mxu0 0.0
        %1269 = vmatpush1.xpose.msra.mxu0 0.0
        %1270 = vmatprep.mubr.f32.mxu0 0.0
        %1271 = vmatmul.mubr.f32.gmra.mrb[0].mxu0 %v1201
        %v1272 = vpop.f32.mrb[0].mxu0
        %v1273 = vadd.f32 0.0, %v1272
        %v1274 = vpop.f32.mrb[0].mxu0
        %1275 = vdwg.mxu0
        %v1277 = vsel %vm1123, %v829, 0
        %v1280 = vsel %vm1123, %v975, 0
        %1282 = vmatprep.subr.mxu0 0.0
        %1283 = vmatpush1.xpose.msra.mxu0 %v1280
        %1284 = vmatprep.subr.mxu0 0.0
        %1285 = vmatpush1.xpose.msra.mxu0 0.0
        %1286 = vmatprep.subr.mxu0 0.0
        %1287 = vmatpush1.xpose.msra.mxu0 0.0
        %1288 = vmatprep.subr.mxu0 0.0
        %1289 = vmatpush1.xpose.msra.mxu0 0.0
        %1290 = vmatprep.subr.mxu0 0.0
        %1291 = vmatpush1.xpose.msra.mxu0 0.0
        %1292 = vmatprep.subr.mxu0 0.0
        %1293 = vmatpush1.xpose.msra.mxu0 0.0
        %1294 = vmatprep.subr.mxu0 0.0
        %1295 = vmatpush1.xpose.msra.mxu0 0.0
        %1296 = vmatprep.subr.mxu0 0.0
        %1297 = vmatpush1.xpose.msra.mxu0 0.0
        %1298 = vmatprep.subr.mxu0 0.0
        %1299 = vmatpush1.xpose.msra.mxu0 0.0
        %1300 = vmatprep.subr.mxu0 0.0
        %1301 = vmatpush1.xpose.msra.mxu0 0.0
        %1302 = vmatprep.subr.mxu0 0.0
        %1303 = vmatpush1.xpose.msra.mxu0 0.0
        %1304 = vmatprep.subr.mxu0 0.0
        %1305 = vmatpush1.xpose.msra.mxu0 0.0
        %1306 = vmatprep.subr.mxu0 0.0
        %1307 = vmatpush1.xpose.msra.mxu0 0.0
        %1308 = vmatprep.subr.mxu0 0.0
        %1309 = vmatpush1.xpose.msra.mxu0 0.0
        %1310 = vmatprep.subr.mxu0 0.0
        %1311 = vmatpush1.xpose.msra.mxu0 0.0
        %1312 = vmatprep.subr.mxu0 0.0
        %1313 = vmatpush1.xpose.msra.mxu0 0.0
        %1314 = vmatprep.subr.mxu0 0.0
        %1315 = vmatpush1.xpose.msra.mxu0 0.0
        %1316 = vmatprep.subr.mxu0 0.0
        %1317 = vmatpush1.xpose.msra.mxu0 0.0
        %1318 = vmatprep.subr.mxu0 0.0
        %1319 = vmatpush1.xpose.msra.mxu0 0.0
        %1320 = vmatprep.subr.mxu0 0.0
        %1321 = vmatpush1.xpose.msra.mxu0 0.0
        %1322 = vmatprep.subr.mxu0 0.0
        %1323 = vmatpush1.xpose.msra.mxu0 0.0
        %1324 = vmatprep.subr.mxu0 0.0
        %1325 = vmatpush1.xpose.msra.mxu0 0.0
        %1326 = vmatprep.subr.mxu0 0.0
        %1327 = vmatpush1.xpose.msra.mxu0 0.0
        %1328 = vmatprep.subr.mxu0 0.0
        %1329 = vmatpush1.xpose.msra.mxu0 0.0
        %1330 = vmatprep.subr.mxu0 0.0
        %1331 = vmatpush1.xpose.msra.mxu0 0.0
        %1332 = vmatprep.subr.mxu0 0.0
        %1333 = vmatpush1.xpose.msra.mxu0 0.0
        %1334 = vmatprep.subr.mxu0 0.0
        %1335 = vmatpush1.xpose.msra.mxu0 0.0
        %1336 = vmatprep.subr.mxu0 0.0
        %1337 = vmatpush1.xpose.msra.mxu0 0.0
        %1338 = vmatprep.subr.mxu0 0.0
        %1339 = vmatpush1.xpose.msra.mxu0 0.0
        %1340 = vmatprep.subr.mxu0 0.0
        %1341 = vmatpush1.xpose.msra.mxu0 0.0
        %1342 = vmatprep.subr.mxu0 0.0
        %1343 = vmatpush1.xpose.msra.mxu0 0.0
        %1344 = vmatprep.subr.mxu0 0.0
        %1345 = vmatpush1.xpose.msra.mxu0 0.0
        %1346 = vmatprep.mubr.f32.mxu0 0.0
        %1347 = vmatmul.mubr.f32.gmra.mrb[0].mxu0 %v1277
        %v1348 = vpop.f32.mrb[0].mxu0
        %v1349 = vadd.f32 0.0, %v1348
        %v1350 = vpop.f32.mrb[0].mxu0
        %1351 = vdwg.mxu0
        %v1353 = vsel %vm1123, %v830, 0
        %v1356 = vsel %vm1123, %v976, 0
        %1358 = vmatprep.subr.mxu0 0.0
        %1359 = vmatpush1.xpose.msra.mxu0 %v1356
        %1360 = vmatprep.subr.mxu0 0.0
        %1361 = vmatpush1.xpose.msra.mxu0 0.0
        %1362 = vmatprep.subr.mxu0 0.0
        %1363 = vmatpush1.xpose.msra.mxu0 0.0
        %1364 = vmatprep.subr.mxu0 0.0
        %1365 = vmatpush1.xpose.msra.mxu0 0.0
        %1366 = vmatprep.subr.mxu0 0.0
        %1367 = vmatpush1.xpose.msra.mxu0 0.0
        %1368 = vmatprep.subr.mxu0 0.0
        %1369 = vmatpush1.xpose.msra.mxu0 0.0
        %1370 = vmatprep.subr.mxu0 0.0
        %1371 = vmatpush1.xpose.msra.mxu0 0.0
        %1372 = vmatprep.subr.mxu0 0.0
        %1373 = vmatpush1.xpose.msra.mxu0 0.0
        %1374 = vmatprep.subr.mxu0 0.0
        %1375 = vmatpush1.xpose.msra.mxu0 0.0
        %1376 = vmatprep.subr.mxu0 0.0
        %1377 = vmatpush1.xpose.msra.mxu0 0.0
        %1378 = vmatprep.subr.mxu0 0.0
        %1379 = vmatpush1.xpose.msra.mxu0 0.0
        %1380 = vmatprep.subr.mxu0 0.0
        %1381 = vmatpush1.xpose.msra.mxu0 0.0
        %1382 = vmatprep.subr.mxu0 0.0
        %1383 = vmatpush1.xpose.msra.mxu0 0.0
        %1384 = vmatprep.subr.mxu0 0.0
        %1385 = vmatpush1.xpose.msra.mxu0 0.0
        %1386 = vmatprep.subr.mxu0 0.0
        %1387 = vmatpush1.xpose.msra.mxu0 0.0
        %1388 = vmatprep.subr.mxu0 0.0
        %1389 = vmatpush1.xpose.msra.mxu0 0.0
        %1390 = vmatprep.subr.mxu0 0.0
        %1391 = vmatpush1.xpose.msra.mxu0 0.0
        %1392 = vmatprep.subr.mxu0 0.0
        %1393 = vmatpush1.xpose.msra.mxu0 0.0
        %1394 = vmatprep.subr.mxu0 0.0
        %1395 = vmatpush1.xpose.msra.mxu0 0.0
        %1396 = vmatprep.subr.mxu0 0.0
        %1397 = vmatpush1.xpose.msra.mxu0 0.0
        %1398 = vmatprep.subr.mxu0 0.0
        %1399 = vmatpush1.xpose.msra.mxu0 0.0
        %1400 = vmatprep.subr.mxu0 0.0
        %1401 = vmatpush1.xpose.msra.mxu0 0.0
        %1402 = vmatprep.subr.mxu0 0.0
        %1403 = vmatpush1.xpose.msra.mxu0 0.0
        %1404 = vmatprep.subr.mxu0 0.0
        %1405 = vmatpush1.xpose.msra.mxu0 0.0
        %1406 = vmatprep.subr.mxu0 0.0
        %1407 = vmatpush1.xpose.msra.mxu0 0.0
        %1408 = vmatprep.subr.mxu0 0.0
        %1409 = vmatpush1.xpose.msra.mxu0 0.0
        %1410 = vmatprep.subr.mxu0 0.0
        %1411 = vmatpush1.xpose.msra.mxu0 0.0
        %1412 = vmatprep.subr.mxu0 0.0
        %1413 = vmatpush1.xpose.msra.mxu0 0.0
        %1414 = vmatprep.subr.mxu0 0.0
        %1415 = vmatpush1.xpose.msra.mxu0 0.0
        %1416 = vmatprep.subr.mxu0 0.0
        %1417 = vmatpush1.xpose.msra.mxu0 0.0
        %1418 = vmatprep.subr.mxu0 0.0
        %1419 = vmatpush1.xpose.msra.mxu0 0.0
        %1420 = vmatprep.subr.mxu0 0.0
        %1421 = vmatpush1.xpose.msra.mxu0 0.0
        %1422 = vmatprep.mubr.f32.mxu0 0.0
        %1423 = vmatmul.mubr.f32.gmra.mrb[0].mxu0 %v1353
        %v1424 = vpop.f32.mrb[0].mxu0
        %v1425 = vadd.f32 0.0, %v1424
        %v1426 = vpop.f32.mrb[0].mxu0
        %1427 = vdwg.mxu0
        %v1428 = vmul.f32 %v1197, 0.35355338
        %v1429 = vmul.f32 %v1273, 0.35355338
        %v1430 = vmul.f32 %v1349, 0.35355338
        %v1431 = vmul.f32 %v1425, 0.35355338
        %v1432 = vld [vmem:[%s7] sm:$0xff]
        %vm1433 = vcmp.ne.f32.partialorder %v1432, 0.0
        %v1434 = vsel %vm1433, 1, 0
        %vm1435 = vcmp.eq.s32.totalorder %v1434, 1
        %v1436 = vsel %vm1435, -1e-05, %v1428
        %v1437 = vsel %vm1435, -1e-05, %v1429
        %v1438 = vsel %vm1435, -1e-05, %v1430
        %v1439 = vsel %vm1435, -1e-05, %v1431
        %v1440 = vsel %vm1123, %v1436, -inf
        %1441 = vmax.xlane.f32.xlu0 %v1440
        %v1442 = vpop.xlane.xlu0 %1441
        %v1443 = vsel %vm1123, %v1437, -inf
        %1444 = vmax.xlane.f32.xlu0 %v1443
        %v1445 = vpop.xlane.xlu0 %1444
        %v1446 = vsel %vm1123, %v1438, -inf
        %1447 = vmax.xlane.f32.xlu0 %v1446
        %v1448 = vpop.xlane.xlu0 %1447
        %v1449 = vsel %vm1123, %v1439, -inf
        %1450 = vmax.xlane.f32.xlu0 %v1449
        %v1451 = vpop.xlane.xlu0 %1450
        %v1452 = vsub.f32 %v1436, %v1442
        %v1453 = vsub.f32 %v1437, %v1445
        %v1454 = vsub.f32 %v1438, %v1448
        %v1455 = vsub.f32 %v1439, %v1451
        %v1456 = vmul.f32 %v1452, 1.442695
        %v1457 = vpow.pop %v1456
        %v1458 = vmul.f32 %v1453, 1.442695
        %v1459 = vpow.pop %v1458
        %v1460 = vmul.f32 %v1454, 1.442695
        %v1461 = vpow.pop %v1460
        %v1462 = vmul.f32 %v1455, 1.442695
        %v1463 = vpow.pop %v1462
        %v1464 = vsel %vm1123, %v1457, 0.0
        %1465 = vadd.xlane.f32.xlu0 %v1464
        %v1466 = vpop.xlane.xlu0 %1465
        %v1467 = vsel %vm1123, %v1459, 0.0
        %1468 = vadd.xlane.f32.xlu0 %v1467
        %v1469 = vpop.xlane.xlu0 %1468
        %v1470 = vsel %vm1123, %v1461, 0.0
        %1471 = vadd.xlane.f32.xlu0 %v1470
        %v1472 = vpop.xlane.xlu0 %1471
        %v1473 = vsel %vm1123, %v1463, 0.0
        %1474 = vadd.xlane.f32.xlu0 %v1473
        %v1475 = vpop.xlane.xlu0 %1474
        %v1477 = vsel %vm1123, %v1457, 0
        %1479 = vmatprep.subr.mxu0 0.0
        %1480 = vmatpush1.msra.mxu0 %v1119
        %1481 = vmatprep.subr.mxu0 0.0
        %1482 = vmatpush1.msra.mxu0 0.0
        %1483 = vmatprep.subr.mxu0 0.0
        %1484 = vmatpush1.msra.mxu0 0.0
        %1485 = vmatprep.subr.mxu0 0.0
        %1486 = vmatpush1.msra.mxu0 0.0
        %1487 = vmatprep.subr.mxu0 0.0
        %1488 = vmatpush1.msra.mxu0 0.0
        %1489 = vmatprep.subr.mxu0 0.0
        %1490 = vmatpush1.msra.mxu0 0.0
        %1491 = vmatprep.subr.mxu0 0.0
        %1492 = vmatpush1.msra.mxu0 0.0
        %1493 = vmatprep.subr.mxu0 0.0
        %1494 = vmatpush1.msra.mxu0 0.0
        %1495 = vmatprep.subr.mxu0 0.0
        %1496 = vmatpush1.msra.mxu0 0.0
        %1497 = vmatprep.subr.mxu0 0.0
        %1498 = vmatpush1.msra.mxu0 0.0
        %1499 = vmatprep.subr.mxu0 0.0
        %1500 = vmatpush1.msra.mxu0 0.0
        %1501 = vmatprep.subr.mxu0 0.0
        %1502 = vmatpush1.msra.mxu0 0.0
        %1503 = vmatprep.subr.mxu0 0.0
        %1504 = vmatpush1.msra.mxu0 0.0
        %1505 = vmatprep.subr.mxu0 0.0
        %1506 = vmatpush1.msra.mxu0 0.0
        %1507 = vmatprep.subr.mxu0 0.0
        %1508 = vmatpush1.msra.mxu0 0.0
        %1509 = vmatprep.subr.mxu0 0.0
        %1510 = vmatpush1.msra.mxu0 0.0
        %1511 = vmatprep.subr.mxu0 0.0
        %1512 = vmatpush1.msra.mxu0 0.0
        %1513 = vmatprep.subr.mxu0 0.0
        %1514 = vmatpush1.msra.mxu0 0.0
        %1515 = vmatprep.subr.mxu0 0.0
        %1516 = vmatpush1.msra.mxu0 0.0
        %1517 = vmatprep.subr.mxu0 0.0
        %1518 = vmatpush1.msra.mxu0 0.0
        %1519 = vmatprep.subr.mxu0 0.0
        %1520 = vmatpush1.msra.mxu0 0.0
        %1521 = vmatprep.subr.mxu0 0.0
        %1522 = vmatpush1.msra.mxu0 0.0
        %1523 = vmatprep.subr.mxu0 0.0
        %1524 = vmatpush1.msra.mxu0 0.0
        %1525 = vmatprep.subr.mxu0 0.0
        %1526 = vmatpush1.msra.mxu0 0.0
        %1527 = vmatprep.subr.mxu0 0.0
        %1528 = vmatpush1.msra.mxu0 0.0
        %1529 = vmatprep.subr.mxu0 0.0
        %1530 = vmatpush1.msra.mxu0 0.0
        %1531 = vmatprep.subr.mxu0 0.0
        %1532 = vmatpush1.msra.mxu0 0.0
        %1533 = vmatprep.subr.mxu0 0.0
        %1534 = vmatpush1.msra.mxu0 0.0
        %1535 = vmatprep.subr.mxu0 0.0
        %1536 = vmatpush1.msra.mxu0 0.0
        %1537 = vmatprep.subr.mxu0 0.0
        %1538 = vmatpush1.msra.mxu0 0.0
        %1539 = vmatprep.subr.mxu0 0.0
        %1540 = vmatpush1.msra.mxu0 0.0
        %1541 = vmatprep.subr.mxu0 0.0
        %1542 = vmatpush1.msra.mxu0 0.0
        %1543 = vmatprep.mubr.f32.mxu0 0.0
        %1544 = vmatmul.mubr.f32.gmra.mrb[0].mxu0 %v1477
        %v1545 = vpop.f32.mrb[0].mxu0
        %v1546 = vadd.f32 0.0, %v1545
        %v1547 = vpop.f32.mrb[0].mxu0
        %1548 = vdwg.mxu0
        %v1550 = vsel %vm1123, %v1459, 0
        %1552 = vmatprep.subr.mxu0 0.0
        %1553 = vmatpush1.msra.mxu0 %v1120
        %1554 = vmatprep.subr.mxu0 0.0
        %1555 = vmatpush1.msra.mxu0 0.0
        %1556 = vmatprep.subr.mxu0 0.0
        %1557 = vmatpush1.msra.mxu0 0.0
        %1558 = vmatprep.subr.mxu0 0.0
        %1559 = vmatpush1.msra.mxu0 0.0
        %1560 = vmatprep.subr.mxu0 0.0
        %1561 = vmatpush1.msra.mxu0 0.0
        %1562 = vmatprep.subr.mxu0 0.0
        %1563 = vmatpush1.msra.mxu0 0.0
        %1564 = vmatprep.subr.mxu0 0.0
        %1565 = vmatpush1.msra.mxu0 0.0
        %1566 = vmatprep.subr.mxu0 0.0
        %1567 = vmatpush1.msra.mxu0 0.0
        %1568 = vmatprep.subr.mxu0 0.0
        %1569 = vmatpush1.msra.mxu0 0.0
        %1570 = vmatprep.subr.mxu0 0.0
        %1571 = vmatpush1.msra.mxu0 0.0
        %1572 = vmatprep.subr.mxu0 0.0
        %1573 = vmatpush1.msra.mxu0 0.0
        %1574 = vmatprep.subr.mxu0 0.0
        %1575 = vmatpush1.msra.mxu0 0.0
        %1576 = vmatprep.subr.mxu0 0.0
        %1577 = vmatpush1.msra.mxu0 0.0
        %1578 = vmatprep.subr.mxu0 0.0
        %1579 = vmatpush1.msra.mxu0 0.0
        %1580 = vmatprep.subr.mxu0 0.0
        %1581 = vmatpush1.msra.mxu0 0.0
        %1582 = vmatprep.subr.mxu0 0.0
        %1583 = vmatpush1.msra.mxu0 0.0
        %1584 = vmatprep.subr.mxu0 0.0
        %1585 = vmatpush1.msra.mxu0 0.0
        %1586 = vmatprep.subr.mxu0 0.0
        %1587 = vmatpush1.msra.mxu0 0.0
        %1588 = vmatprep.subr.mxu0 0.0
        %1589 = vmatpush1.msra.mxu0 0.0
        %1590 = vmatprep.subr.mxu0 0.0
        %1591 = vmatpush1.msra.mxu0 0.0
        %1592 = vmatprep.subr.mxu0 0.0
        %1593 = vmatpush1.msra.mxu0 0.0
        %1594 = vmatprep.subr.mxu0 0.0
        %1595 = vmatpush1.msra.mxu0 0.0
        %1596 = vmatprep.subr.mxu0 0.0
        %1597 = vmatpush1.msra.mxu0 0.0
        %1598 = vmatprep.subr.mxu0 0.0
        %1599 = vmatpush1.msra.mxu0 0.0
        %1600 = vmatprep.subr.mxu0 0.0
        %1601 = vmatpush1.msra.mxu0 0.0
        %1602 = vmatprep.subr.mxu0 0.0
        %1603 = vmatpush1.msra.mxu0 0.0
        %1604 = vmatprep.subr.mxu0 0.0
        %1605 = vmatpush1.msra.mxu0 0.0
        %1606 = vmatprep.subr.mxu0 0.0
        %1607 = vmatpush1.msra.mxu0 0.0
        %1608 = vmatprep.subr.mxu0 0.0
        %1609 = vmatpush1.msra.mxu0 0.0
        %1610 = vmatprep.subr.mxu0 0.0
        %1611 = vmatpush1.msra.mxu0 0.0
        %1612 = vmatprep.subr.mxu0 0.0
        %1613 = vmatpush1.msra.mxu0 0.0
        %1614 = vmatprep.subr.mxu0 0.0
        %1615 = vmatpush1.msra.mxu0 0.0
        %1616 = vmatprep.mubr.f32.mxu0 0.0
        %1617 = vmatmul.mubr.f32.gmra.mrb[0].mxu0 %v1550
        %v1618 = vpop.f32.mrb[0].mxu0
        %v1619 = vadd.f32 0.0, %v1618
        %v1620 = vpop.f32.mrb[0].mxu0
        %1621 = vdwg.mxu0
        %v1623 = vsel %vm1123, %v1461, 0
        %1625 = vmatprep.subr.mxu0 0.0
        %1626 = vmatpush1.msra.mxu0 %v1121
        %1627 = vmatprep.subr.mxu0 0.0
        %1628 = vmatpush1.msra.mxu0 0.0
        %1629 = vmatprep.subr.mxu0 0.0
        %1630 = vmatpush1.msra.mxu0 0.0
        %1631 = vmatprep.subr.mxu0 0.0
        %1632 = vmatpush1.msra.mxu0 0.0
        %1633 = vmatprep.subr.mxu0 0.0
        %1634 = vmatpush1.msra.mxu0 0.0
        %1635 = vmatprep.subr.mxu0 0.0
        %1636 = vmatpush1.msra.mxu0 0.0
        %1637 = vmatprep.subr.mxu0 0.0
        %1638 = vmatpush1.msra.mxu0 0.0
        %1639 = vmatprep.subr.mxu0 0.0
        %1640 = vmatpush1.msra.mxu0 0.0
        %1641 = vmatprep.subr.mxu0 0.0
        %1642 = vmatpush1.msra.mxu0 0.0
        %1643 = vmatprep.subr.mxu0 0.0
        %1644 = vmatpush1.msra.mxu0 0.0
        %1645 = vmatprep.subr.mxu0 0.0
        %1646 = vmatpush1.msra.mxu0 0.0
        %1647 = vmatprep.subr.mxu0 0.0
        %1648 = vmatpush1.msra.mxu0 0.0
        %1649 = vmatprep.subr.mxu0 0.0
        %1650 = vmatpush1.msra.mxu0 0.0
        %1651 = vmatprep.subr.mxu0 0.0
        %1652 = vmatpush1.msra.mxu0 0.0
        %1653 = vmatprep.subr.mxu0 0.0
        %1654 = vmatpush1.msra.mxu0 0.0
        %1655 = vmatprep.subr.mxu0 0.0
        %1656 = vmatpush1.msra.mxu0 0.0
        %1657 = vmatprep.subr.mxu0 0.0
        %1658 = vmatpush1.msra.mxu0 0.0
        %1659 = vmatprep.subr.mxu0 0.0
        %1660 = vmatpush1.msra.mxu0 0.0
        %1661 = vmatprep.subr.mxu0 0.0
        %1662 = vmatpush1.msra.mxu0 0.0
        %1663 = vmatprep.subr.mxu0 0.0
        %1664 = vmatpush1.msra.mxu0 0.0
        %1665 = vmatprep.subr.mxu0 0.0
        %1666 = vmatpush1.msra.mxu0 0.0
        %1667 = vmatprep.subr.mxu0 0.0
        %1668 = vmatpush1.msra.mxu0 0.0
        %1669 = vmatprep.subr.mxu0 0.0
        %1670 = vmatpush1.msra.mxu0 0.0
        %1671 = vmatprep.subr.mxu0 0.0
        %1672 = vmatpush1.msra.mxu0 0.0
        %1673 = vmatprep.subr.mxu0 0.0
        %1674 = vmatpush1.msra.mxu0 0.0
        %1675 = vmatprep.subr.mxu0 0.0
        %1676 = vmatpush1.msra.mxu0 0.0
        %1677 = vmatprep.subr.mxu0 0.0
        %1678 = vmatpush1.msra.mxu0 0.0
        %1679 = vmatprep.subr.mxu0 0.0
        %1680 = vmatpush1.msra.mxu0 0.0
        %1681 = vmatprep.subr.mxu0 0.0
        %1682 = vmatpush1.msra.mxu0 0.0
        %1683 = vmatprep.subr.mxu0 0.0
        %1684 = vmatpush1.msra.mxu0 0.0
        %1685 = vmatprep.subr.mxu0 0.0
        %1686 = vmatpush1.msra.mxu0 0.0
        %1687 = vmatprep.subr.mxu0 0.0
        %1688 = vmatpush1.msra.mxu0 0.0
        %1689 = vmatprep.mubr.f32.mxu0 0.0
        %1690 = vmatmul.mubr.f32.gmra.mrb[0].mxu0 %v1623
        %v1691 = vpop.f32.mrb[0].mxu0
        %v1692 = vadd.f32 0.0, %v1691
        %v1693 = vpop.f32.mrb[0].mxu0
        %1694 = vdwg.mxu0
        %v1696 = vsel %vm1123, %v1463, 0
        %1698 = vmatprep.subr.mxu0 0.0
        %1699 = vmatpush1.msra.mxu0 %v1122
        %1700 = vmatprep.subr.mxu0 0.0
        %1701 = vmatpush1.msra.mxu0 0.0
        %1702 = vmatprep.subr.mxu0 0.0
        %1703 = vmatpush1.msra.mxu0 0.0
        %1704 = vmatprep.subr.mxu0 0.0
        %1705 = vmatpush1.msra.mxu0 0.0
        %1706 = vmatprep.subr.mxu0 0.0
        %1707 = vmatpush1.msra.mxu0 0.0
        %1708 = vmatprep.subr.mxu0 0.0
        %1709 = vmatpush1.msra.mxu0 0.0
        %1710 = vmatprep.subr.mxu0 0.0
        %1711 = vmatpush1.msra.mxu0 0.0
        %1712 = vmatprep.subr.mxu0 0.0
        %1713 = vmatpush1.msra.mxu0 0.0
        %1714 = vmatprep.subr.mxu0 0.0
        %1715 = vmatpush1.msra.mxu0 0.0
        %1716 = vmatprep.subr.mxu0 0.0
        %1717 = vmatpush1.msra.mxu0 0.0
        %1718 = vmatprep.subr.mxu0 0.0
        %1719 = vmatpush1.msra.mxu0 0.0
        %1720 = vmatprep.subr.mxu0 0.0
        %1721 = vmatpush1.msra.mxu0 0.0
        %1722 = vmatprep.subr.mxu0 0.0
        %1723 = vmatpush1.msra.mxu0 0.0
        %1724 = vmatprep.subr.mxu0 0.0
        %1725 = vmatpush1.msra.mxu0 0.0
        %1726 = vmatprep.subr.mxu0 0.0
        %1727 = vmatpush1.msra.mxu0 0.0
        %1728 = vmatprep.subr.mxu0 0.0
        %1729 = vmatpush1.msra.mxu0 0.0
        %1730 = vmatprep.subr.mxu0 0.0
        %1731 = vmatpush1.msra.mxu0 0.0
        %1732 = vmatprep.subr.mxu0 0.0
        %1733 = vmatpush1.msra.mxu0 0.0
        %1734 = vmatprep.subr.mxu0 0.0
        %1735 = vmatpush1.msra.mxu0 0.0
        %1736 = vmatprep.subr.mxu0 0.0
        %1737 = vmatpush1.msra.mxu0 0.0
        %1738 = vmatprep.subr.mxu0 0.0
        %1739 = vmatpush1.msra.mxu0 0.0
        %1740 = vmatprep.subr.mxu0 0.0
        %1741 = vmatpush1.msra.mxu0 0.0
        %1742 = vmatprep.subr.mxu0 0.0
        %1743 = vmatpush1.msra.mxu0 0.0
        %1744 = vmatprep.subr.mxu0 0.0
        %1745 = vmatpush1.msra.mxu0 0.0
        %1746 = vmatprep.subr.mxu0 0.0
        %1747 = vmatpush1.msra.mxu0 0.0
        %1748 = vmatprep.subr.mxu0 0.0
        %1749 = vmatpush1.msra.mxu0 0.0
        %1750 = vmatprep.subr.mxu0 0.0
        %1751 = vmatpush1.msra.mxu0 0.0
        %1752 = vmatprep.subr.mxu0 0.0
        %1753 = vmatpush1.msra.mxu0 0.0
        %1754 = vmatprep.subr.mxu0 0.0
        %1755 = vmatpush1.msra.mxu0 0.0
        %1756 = vmatprep.subr.mxu0 0.0
        %1757 = vmatpush1.msra.mxu0 0.0
        %1758 = vmatprep.subr.mxu0 0.0
        %1759 = vmatpush1.msra.mxu0 0.0
        %1760 = vmatprep.subr.mxu0 0.0
        %1761 = vmatpush1.msra.mxu0 0.0
        %1762 = vmatprep.mubr.f32.mxu0 0.0
        %1763 = vmatmul.mubr.f32.gmra.mrb[0].mxu0 %v1696
        %v1764 = vpop.f32.mrb[0].mxu0
        %v1765 = vadd.f32 0.0, %v1764
        %v1766 = vpop.f32.mrb[0].mxu0
        %1767 = vdwg.mxu0
        %v1768 = vrcp.pop %v1466
        %v1769 = vmul.f32 1.0, %v1768
        %v1770 = vrcp.pop %v1469
        %v1771 = vmul.f32 1.0, %v1770
        %v1772 = vrcp.pop %v1472
        %v1773 = vmul.f32 1.0, %v1772
        %v1774 = vrcp.pop %v1475
        %v1775 = vmul.f32 1.0, %v1774
        %v1776 = vmul.f32 %v1546, %v1769
        %v1777 = vmul.f32 %v1619, %v1771
        %v1778 = vmul.f32 %v1692, %v1773
        %v1779 = vmul.f32 %v1765, %v1775
        %v1780 = vcombine.low %v1776, %v1778
        %v1781 = vcombine.high %v1776, %v1778
        %v1783 = vunpack.c.l.s4 1983009808
        %v1784 = vunpack.c.0.s8 %v1783
        %v1785 = vlaneseq
        %v1786 = vshrl.u32 %v1785, 7
        %v1787 = vsub.s32 %v1784, %v1786
        %v1788 = vrot.slane %v1780, %v1787
        %v1790 = vunpack.c.l.s4 1983009808
        %v1791 = vunpack.c.0.s8 %v1790
        %v1792 = vlaneseq
        %v1793 = vshrl.u32 %v1792, 7
        %v1794 = vsub.s32 %v1791, %v1793
        %v1795 = vrot.slane %v1781, %v1794
        %v1796 = vcombine.low %v1777, %v1779
        %v1797 = vcombine.high %v1777, %v1779
        %v1799 = vunpack.c.l.s4 1983009808
        %v1800 = vunpack.c.0.s8 %v1799
        %v1801 = vlaneseq
        %v1802 = vshrl.u32 %v1801, 7
        %v1803 = vsub.s32 %v1800, %v1802
        %v1804 = vrot.slane %v1796, %v1803
        %v1806 = vunpack.c.l.s4 1983009808
        %v1807 = vunpack.c.0.s8 %v1806
        %v1808 = vlaneseq
        %v1809 = vshrl.u32 %v1808, 7
        %v1810 = vsub.s32 %v1807, %v1809
        %v1811 = vrot.slane %v1797, %v1810
        %v1812 = vcombine.low %v1788, %v1804
        %v1813 = vcombine.high %v1788, %v1804
        %v1815 = vunpack.c.l.s4 1934713408
        %v1816 = vunpack.c.0.s8 %v1815
        %v1817 = vlaneseq
        %v1818 = vshrl.u32 %v1817, 7
        %v1819 = vsub.s32 %v1816, %v1818
        %v1820 = vrot.slane %v1812, %v1819
        %v1822 = vunpack.c.l.s4 1934713408
        %v1823 = vunpack.c.0.s8 %v1822
        %v1824 = vlaneseq
        %v1825 = vshrl.u32 %v1824, 7
        %v1826 = vsub.s32 %v1823, %v1825
        %v1827 = vrot.slane %v1813, %v1826
        %v1828 = vcombine.low %v1795, %v1811
        %v1829 = vcombine.high %v1795, %v1811
        %v1831 = vunpack.c.l.s4 1934713408
        %v1832 = vunpack.c.0.s8 %v1831
        %v1833 = vlaneseq
        %v1834 = vshrl.u32 %v1833, 7
        %v1835 = vsub.s32 %v1832, %v1834
        %v1836 = vrot.slane %v1828, %v1835
        %v1838 = vunpack.c.l.s4 1934713408
        %v1839 = vunpack.c.0.s8 %v1838
        %v1840 = vlaneseq
        %v1841 = vshrl.u32 %v1840, 7
        %v1842 = vsub.s32 %v1839, %v1841
        %v1843 = vrot.slane %v1829, %v1842
        %v1844 = vcombine.high %v1820, 0.0
        %v1845 = vcombine.high %v1827, 0.0
        %v1846 = vcombine.high %v1836, 0.0
        %v1847 = vcombine.high %v1843, 0.0
        %v1848 = vcombine.low %v1820, %v1827
        %v1850 = vunpack.c.l.s4 1983009808
        %v1851 = vunpack.c.0.s8 %v1850
        %v1852 = vlaneseq
        %v1853 = vshrl.u32 %v1852, 7
        %v1854 = vsub.s32 %v1851, %v1853
        %v1855 = vrot.slane %v1848, %v1854
        %v1856 = vcombine.low %v1844, %v1845
        %v1858 = vunpack.c.l.s4 1983009808
        %v1859 = vunpack.c.0.s8 %v1858
        %v1860 = vlaneseq
        %v1861 = vshrl.u32 %v1860, 7
        %v1862 = vsub.s32 %v1859, %v1861
        %v1863 = vrot.slane %v1856, %v1862
        %v1864 = vcombine.low %v1836, %v1843
        %v1866 = vunpack.c.l.s4 1983009808
        %v1867 = vunpack.c.0.s8 %v1866
        %v1868 = vlaneseq
        %v1869 = vshrl.u32 %v1868, 7
        %v1870 = vsub.s32 %v1867, %v1869
        %v1871 = vrot.slane %v1864, %v1870
        %v1872 = vcombine.low %v1846, %v1847
        %v1874 = vunpack.c.l.s4 1983009808
        %v1875 = vunpack.c.0.s8 %v1874
        %v1876 = vlaneseq
        %v1877 = vshrl.u32 %v1876, 7
        %v1878 = vsub.s32 %v1875, %v1877
        %v1879 = vrot.slane %v1872, %v1878
        %v1880 = vcombine.low %v1855, %v1863
        %v1881 = vcombine.high %v1855, %v1863
        %v1883 = vunpack.c.l.s4 1934713408
        %v1884 = vunpack.c.0.s8 %v1883
        %v1885 = vlaneseq
        %v1886 = vshrl.u32 %v1885, 7
        %v1887 = vsub.s32 %v1884, %v1886
        %v1888 = vrot.slane %v1880, %v1887
        %v1890 = vunpack.c.l.s4 1934713408
        %v1891 = vunpack.c.0.s8 %v1890
        %v1892 = vlaneseq
        %v1893 = vshrl.u32 %v1892, 7
        %v1894 = vsub.s32 %v1891, %v1893
        %v1895 = vrot.slane %v1881, %v1894
        %v1896 = vcombine.low %v1871, %v1879
        %v1897 = vcombine.high %v1871, %v1879
        %v1899 = vunpack.c.l.s4 1934713408
        %v1900 = vunpack.c.0.s8 %v1899
        %v1901 = vlaneseq
        %v1902 = vshrl.u32 %v1901, 7
        %v1903 = vsub.s32 %v1900, %v1902
        %v1904 = vrot.slane %v1896, %v1903
        %v1906 = vunpack.c.l.s4 1934713408
        %v1907 = vunpack.c.0.s8 %v1906
        %v1908 = vlaneseq
        %v1909 = vshrl.u32 %v1908, 7
        %v1910 = vsub.s32 %v1907, %v1909
        %v1911 = vrot.slane %v1897, %v1910
        %v1912 = vcombine.low %v1888, %v1904
        %v1913 = vcombine.high %v1888, %v1904
        %v1914 = vcombine.low %v1895, %v1911
        %v1915 = vcombine.high %v1895, %v1911
        %1917 = vrot.lane.b32.xlu0 %v1913, 8
        %v1918 = vpop.permute.xlu0 %1917
        %1921 = vrot.lane.b32.xlu0 %v1914, 16
        %v1922 = vpop.permute.xlu0 %1921
        %1925 = vrot.lane.b32.xlu0 %v1915, 24
        %v1926 = vpop.permute.xlu0 %1925
        %v1928 = vsel %vm1123, %v1912, %v1918
        %vm1929 = vcmask 130048
        %v1930 = vsel %vm1929, %v1928, %v1922
        %vm1931 = vcmask 195584
        %v1932 = vsel %vm1931, %v1930, %v1926
        %v1933 = vld [vmem:[#allocation13] sm:$0xff]
        %v1934 = vld [vmem:[#allocation13 + $0x8] sm:$0xff]
        %v1935 = vld [vmem:[#allocation13 + $0x10] sm:$0xff]
        %v1936 = vld [vmem:[#allocation13 + $0x18] sm:$0xff]
        %v1938 = vsel %vm457, %v1932, 0
        %1940 = vmatprep.subr.mxu0 0.0
        %1941 = vmatpush1.msra.mxu0 %v1933
        %1942 = vmatprep.subr.mxu0 0.0
        %1943 = vmatpush1.msra.mxu0 %v1934
        %1944 = vmatprep.subr.mxu0 0.0
        %1945 = vmatpush1.msra.mxu0 %v1935
        %1946 = vmatprep.subr.mxu0 0.0
        %1947 = vmatpush1.msra.mxu0 %v1936
        %1948 = vmatprep.subr.mxu0 0.0
        %1949 = vmatpush1.msra.mxu0 0.0
        %1950 = vmatprep.subr.mxu0 0.0
        %1951 = vmatpush1.msra.mxu0 0.0
        %1952 = vmatprep.subr.mxu0 0.0
        %1953 = vmatpush1.msra.mxu0 0.0
        %1954 = vmatprep.subr.mxu0 0.0
        %1955 = vmatpush1.msra.mxu0 0.0
        %1956 = vmatprep.subr.mxu0 0.0
        %1957 = vmatpush1.msra.mxu0 0.0
        %1958 = vmatprep.subr.mxu0 0.0
        %1959 = vmatpush1.msra.mxu0 0.0
        %1960 = vmatprep.subr.mxu0 0.0
        %1961 = vmatpush1.msra.mxu0 0.0
        %1962 = vmatprep.subr.mxu0 0.0
        %1963 = vmatpush1.msra.mxu0 0.0
        %1964 = vmatprep.subr.mxu0 0.0
        %1965 = vmatpush1.msra.mxu0 0.0
        %1966 = vmatprep.subr.mxu0 0.0
        %1967 = vmatpush1.msra.mxu0 0.0
        %1968 = vmatprep.subr.mxu0 0.0
        %1969 = vmatpush1.msra.mxu0 0.0
        %1970 = vmatprep.subr.mxu0 0.0
        %1971 = vmatpush1.msra.mxu0 0.0
        %1972 = vmatprep.subr.mxu0 0.0
        %1973 = vmatpush1.msra.mxu0 0.0
        %1974 = vmatprep.subr.mxu0 0.0
        %1975 = vmatpush1.msra.mxu0 0.0
        %1976 = vmatprep.subr.mxu0 0.0
        %1977 = vmatpush1.msra.mxu0 0.0
        %1978 = vmatprep.subr.mxu0 0.0
        %1979 = vmatpush1.msra.mxu0 0.0
        %1980 = vmatprep.subr.mxu0 0.0
        %1981 = vmatpush1.msra.mxu0 0.0
        %1982 = vmatprep.subr.mxu0 0.0
        %1983 = vmatpush1.msra.mxu0 0.0
        %1984 = vmatprep.subr.mxu0 0.0
        %1985 = vmatpush1.msra.mxu0 0.0
        %1986 = vmatprep.subr.mxu0 0.0
        %1987 = vmatpush1.msra.mxu0 0.0
        %1988 = vmatprep.subr.mxu0 0.0
        %1989 = vmatpush1.msra.mxu0 0.0
        %1990 = vmatprep.subr.mxu0 0.0
        %1991 = vmatpush1.msra.mxu0 0.0
        %1992 = vmatprep.subr.mxu0 0.0
        %1993 = vmatpush1.msra.mxu0 0.0
        %1994 = vmatprep.subr.mxu0 0.0
        %1995 = vmatpush1.msra.mxu0 0.0
        %1996 = vmatprep.subr.mxu0 0.0
        %1997 = vmatpush1.msra.mxu0 0.0
        %1998 = vmatprep.subr.mxu0 0.0
        %1999 = vmatpush1.msra.mxu0 0.0
        %2000 = vmatprep.subr.mxu0 0.0
        %2001 = vmatpush1.msra.mxu0 0.0
        %2002 = vmatprep.subr.mxu0 0.0
        %2003 = vmatpush1.msra.mxu0 0.0
        %2004 = vmatprep.mubr.f32.mxu0 0.0
        %2005 = vmatmul.mubr.f32.gmra.mrb[0].mxu0 %v1938
        %v2006 = vpop.f32.mrb[0].mxu0
        %v2007 = vadd.f32 0.0, %v2006
        %v2008 = vpop.f32.mrb[0].mxu0
        %2009 = vdwg.mxu0
        %2010 = vst.msk [vmem:[%s449] sm:$0xff] %vm457, %v2007
        %s2011 = sand.u32 %s221, 1
        %s2012 = scalar_lea.sflag [#allocation4], %s2011
        %s2013 = sand.u32 %s221, 1
        %s2014 = smul.addr %s2013, 8
        %s2015 = scalar_lea.vmem [#allocation14], %s2014
        // Predicated region
        $region81: #{tpu_custom_call.1} parent=51 // pred_check
          %p2016 = pneg %p231
        $region82: #{tpu_custom_call.1} parent=51 // pred_check_branch
          %2018 = sbr.rel (%p2016) target = $region84
        $region83: #{tpu_custom_call.1} parent=51 // pred_region
          %s2020 = ssub.s32 128, 128
          %2021 = vsyncadd %s2012, %s2020
          %s2022 = smul.addr %s30, 128
          %s2023 = scalar_lea.hbm %s8, %s2022
          %s2025 = sshll.u32 %s2015, 4
          %s2026 = int_to_ptr.vmem [resolvable:$true] %s2025
          %2028 = dma.vmem_to_hbm [thread:$0]  %s2026, 128, %s2023, %s2012
        $region84: #{tpu_custom_call.1} parent=51 // pred_fallthru
          _
      $region52: #{tpu_custom_call.1} parent=5 // pred_fallthru
        _
      %p2029 = scmp.le.s32.totalorder 2, %s25
      // Predicated region
      $region85: #{tpu_custom_call.1} parent=5 // pred_check
        %p2030 = pneg %p2029
      $region86: #{tpu_custom_call.1} parent=5 // pred_check_branch
        %2032 = sbr.rel (%p2030) target = $region88
      $region87: #{tpu_custom_call.1} parent=5 // pred_region
        %s2033 = ssub.s32 %s25, 2
        // Predicated region
        $region89: #{tpu_custom_call.1} parent=87 // pred_check
          %p2034 = pneg %p237
        $region90: #{tpu_custom_call.1} parent=87 // pred_check_branch
          %2036 = sbr.rel (%p2034) target = $region92
        $region91: #{tpu_custom_call.1} parent=87 // pred_region
          %s2037 = sand.u32 %s222, 1
          %s2038 = scalar_lea.sflag [#allocation4], %s2037
          %s2039 = sand.u32 %s222, 1
          %s2040 = smul.addr %s2039, 8
          %s2041 = scalar_lea.vmem [#allocation14], %s2040
          %2042 = dma.done %s2038, 128
        $region92: #{tpu_custom_call.1} parent=87 // pred_fallthru
          _
      $region88: #{tpu_custom_call.1} parent=5 // pred_fallthru
        _
    $region6: #{tpu_custom_call.1} parent=1 // loop_footer
      %s29 = sadd.s32 1, %s25
    $region7: #{tpu_custom_call.1} parent=1 // loop_footer_branch
      %24 = sbr.rel target = $region3
    $region8: #{tpu_custom_call.1} parent=1 // loop_exit
      _
    %2043 = vsyncpa [#allocation3], 1
    %s2044 = scalar_lea.sflag [#allocation3], 1
    %2045 = vsyncpa %s2044, 1
    %2046 = vsyncpa [#allocation6], 1
    %s2047 = scalar_lea.sflag [#allocation6], 1
    %2048 = vsyncpa %s2047, 1
    %2049 = vsyncpa [#allocation9], 1
    %2050 = vsyncpa [#allocation12], 1
    %2051 = vsyncpa [#allocation4], 1
    %s2052 = scalar_lea.sflag [#allocation4], 1
    %2053 = vsyncpa %s2052, 1

</llo_original>
